<compile_context>
chip_gen: v6e
topology: v6e:2x2x1
jax: 0.10.0
libtpu: 0.0.40
codegen_flags: <defaults>
</compile_context>

<pallas_src>
import jax
import jax.numpy as jnp
from jax.experimental import pallas as pl
from jax.experimental.pallas import tpu as pltpu

EPS = 1e-6


# --------------------------------------------------------------------------
# VMEM budgeting helpers
# --------------------------------------------------------------------------
def _round_up(x, m):
    return ((x + m - 1) // m) * m


def _vmem_limit_bytes():
    """Scoped VMEM limit to request: ~3/4 of physical, capped at 96 MiB."""
    try:
        cap = int(pltpu.get_tpu_info().vmem_capacity_bytes)
    except Exception:
        cap = 64 * 1024 * 1024  # conservative (v7x-sized) fallback
    return min((cap * 3) // 4, 96 * 1024 * 1024)


_VMEM_LIMIT = _vmem_limit_bytes()


def _conv_tiles(M, Cin, Cout, vmem_limit, cap):
    """Pick (tile_m, padded_M) for the fused QKV 1x1 conv."""
    per_row = 2 * Cin * 2 + 2 * Cout * 2 + Cout * 4   # dbl-buffered x/out + f32 acc
    resident = Cin * Cout * 2 + Cout * 4              # weights + bias
    budget = max(int(vmem_limit * 0.6) - resident, 8 * per_row)
    tm_max = max(256, min(cap, (budget // per_row) // 8 * 8))
    if M <= tm_max:
        tm = _round_up(M, 8)
        return tm, tm
    nblk = pl.cdiv(M, tm_max)
    tm = _round_up(pl.cdiv(M, nblk), 8)
    return tm, nblk * tm


def _attn_tiles(L1, L2, C2, C, vmem_limit, cap):
    """Pick (tile_l1, padded_L1) for the attention + z kernel (VMEM-aware)."""
    resident = 2 * L2 * C2 * 2 + L2 * 4 + C2 * C * 2 + C * 4     # phi_t, g, d2, wz, bz
    # ~6 live (tl, L2) f32 temporaries in the softmax chain dominate,
    # plus double-buffered theta / d1 / out tiles.
    per_row = 6 * L2 * 4 + 2 * (C2 * 2 + 4 + C * 4)
    budget = max(int(vmem_limit * 0.6) - resident, 128 * per_row)
    tl_max = max(128, min(cap, (budget // per_row) // 8 * 8))
    if L1 <= tl_max:
        tl = _round_up(L1, 8)
        return tl, tl
    nblk = pl.cdiv(L1, tl_max)
    tl = _round_up(pl.cdiv(L1, nblk), 8)
    return tl, nblk * tl


# --------------------------------------------------------------------------
# Fused theta/phi/g 1x1 conv:  (M, Cin) @ (Cin, 3*C2) + b   (bf16 in, f32 acc)
# --------------------------------------------------------------------------
def _fused_conv1x1_kernel(x_ref, w_ref, b_ref, o_ref):
    acc = jnp.dot(x_ref[...], w_ref[...], preferred_element_type=jnp.float32)
    o_ref[...] = (acc + b_ref[...]).astype(o_ref.dtype)


def fused_conv1x1(x_flat, w, b, *, tile_m_cap=2048, out_dtype=jnp.bfloat16):
    M, Cin = x_flat.shape
    Cout = w.shape[1]
    tm, Mp = _conv_tiles(M, Cin, Cout, _VMEM_LIMIT, tile_m_cap)
    if Mp != M:
        x_flat = jnp.pad(x_flat, ((0, Mp - M), (0, 0)))
    out = pl.pallas_call(
        _fused_conv1x1_kernel,
        out_shape=jax.ShapeDtypeStruct((Mp, Cout), out_dtype),
        grid=(Mp // tm,),
        in_specs=[
            pl.BlockSpec((tm, Cin), lambda i: (i, 0)),
            pl.BlockSpec((Cin, Cout), lambda i: (0, 0)),   # weights stay resident
            pl.BlockSpec((1, Cout), lambda i: (0, 0)),
        ],
        out_specs=pl.BlockSpec((tm, Cout), lambda i: (i, 0)),
        compiler_params=pltpu.CompilerParams(
            dimension_semantics=("parallel",),
            vmem_limit_bytes=_VMEM_LIMIT),
    )(x_flat, w, b.reshape(1, Cout))
    return out[:M] if Mp != M else out


# --------------------------------------------------------------------------
# Attention core + fused z 1x1 conv, tiled over (batch, L1)
# --------------------------------------------------------------------------
def _attn_z_kernel(theta_ref, phi_t_ref, g_ref, d1_ref, d2_ref, wz_ref, bz_ref,
                   o_ref):
    # Per (batch, L1-tile) block (batch dim squeezed by BlockSpec):
    #   theta: (TL1, C2) bf16   phi_t: (C2, L2) bf16   g: (L2, C2) bf16
    #   d1: (TL1, 1) f32        d2: (1, L2) f32
    #   wz: (C2, C) bf16        bz: (1, C) f32      out: (TL1, C) f32
    theta = theta_ref[...]
    phi_t = phi_t_ref[...]
    g = g_ref[...]
    d1 = d1_ref[...]
    d2 = d2_ref[...]

    # Ra (unnormalized): exp(theta @ phi - rowmax).  Plain NN matmul (phi was
    # pre-transposed in the wrapper, so no per-tile XLU transpose).
    scores = jnp.dot(theta, phi_t, preferred_element_type=jnp.float32)
    ra_e = jnp.exp(scores - jnp.max(scores, axis=-1, keepdims=True))
    ra_norm = pl.reciprocal(jnp.sum(ra_e, axis=-1, keepdims=True), approx=True)

    # Rd (unnormalized): min(d1/(d2+eps), d2/(d1+eps)) <= 1 for any depth sign,
    # so exp cannot overflow -> no max-shift pass.  Reciprocals only on the
    # small vectors (EUP), broadcast multiplies instead of (TL1,L2) divides.
    inv_d1 = pl.reciprocal(d1 + EPS, approx=True)
    inv_d2 = pl.reciprocal(d2 + EPS, approx=True)
    rd_logits = jnp.minimum(d1 * inv_d2, d2 * inv_d1)
    rd_e = jnp.exp(rd_logits)
    rd_norm = pl.reciprocal(jnp.sum(rd_e, axis=-1, keepdims=True), approx=True)

    # Deferred normalization: Ra*Rd = (ra_e*rd_e) * (ra_norm*rd_norm); the two
    # per-row reciprocals fold into one (TL1,1) scalar -> one fewer full-tile mul.
    s_logits = (ra_e * rd_e) * (ra_norm * rd_norm)
    # S = softmax(Ra*Rd): logits are in (0, ~1], exp cannot overflow -> no shift.
    s_e = jnp.exp(s_logits)
    s = s_e * pl.reciprocal(jnp.sum(s_e, axis=-1, keepdims=True), approx=True)

    # y = S @ g ; z = y @ w_z + b_z  (fused epilogue: no HBM round trip of y)
    y = jnp.dot(s.astype(jnp.bfloat16), g, preferred_element_type=jnp.float32)
    z = jnp.dot(y.astype(jnp.bfloat16), wz_ref[...],
                preferred_element_type=jnp.float32) + bz_ref[...]
    o_ref[...] = z.astype(o_ref.dtype)


def mtur_attention_z(theta, phi_t, g, d1, d2, w_z, b_z, *, tile_l1_cap=512):
    """theta:(n,L1,C2) phi_t:(n,C2,L2) g:(n,L2,C2) d1:(n,L1,1) d2:(n,1,L2) -> (n,L1,C)."""
    n, L1, C2 = theta.shape
    L2 = phi_t.shape[2]
    C = w_z.shape[1]
    tl, L1p = _attn_tiles(L1, L2, C2, C, _VMEM_LIMIT, tile_l1_cap)
    if L1p != L1:
        pad = L1p - L1
        theta = jnp.pad(theta, ((0, 0), (0, pad), (0, 0)))
        d1 = jnp.pad(d1, ((0, 0), (0, pad), (0, 0)))
    out = pl.pallas_call(
        _attn_z_kernel,
        out_shape=jax.ShapeDtypeStruct((n, L1p, C), jnp.float32),
        grid=(n, L1p // tl),
        in_specs=[
            pl.BlockSpec((None, tl, C2), lambda b, i: (b, i, 0)),
            pl.BlockSpec((None, C2, L2), lambda b, i: (b, 0, 0)),  # resident over i
            pl.BlockSpec((None, L2, C2), lambda b, i: (b, 0, 0)),  # resident over i
            pl.BlockSpec((None, tl, 1), lambda b, i: (b, i, 0)),
            pl.BlockSpec((None, 1, L2), lambda b, i: (b, 0, 0)),   # resident over i
            pl.BlockSpec((C2, C), lambda b, i: (0, 0)),            # z weights resident
            pl.BlockSpec((1, C), lambda b, i: (0, 0)),
        ],
        out_specs=pl.BlockSpec((None, tl, C), lambda b, i: (b, i, 0)),
        compiler_params=pltpu.CompilerParams(
            dimension_semantics=("parallel", "parallel"),
            vmem_limit_bytes=_VMEM_LIMIT),
    )(theta, phi_t, g, d1, d2, w_z, b_z.reshape(1, C))
    return out[:, :L1, :] if L1p != L1 else out


# --------------------------------------------------------------------------
# Plain-JAX glue
# --------------------------------------------------------------------------
def _interp_matrix(out_size, in_size):
    """Row-stochastic (out_size, in_size) bilinear matrix, align_corners=True."""
    if out_size == 1:
        return jnp.zeros((1, in_size), jnp.float32).at[0, 0].set(1.0)
    pos = jnp.arange(out_size, dtype=jnp.float32) * ((in_size - 1) / (out_size - 1))
    lo = jnp.floor(pos).astype(jnp.int32)
    hi = jnp.minimum(lo + 1, in_size - 1)
    frac = pos - lo.astype(jnp.float32)
    idx = jnp.arange(in_size, dtype=jnp.int32)[None, :]
    return ((idx == lo[:, None]).astype(jnp.float32) * (1.0 - frac)[:, None]
            + (idx == hi[:, None]).astype(jnp.float32) * frac[:, None])


def bilinear_ac(x, out_h, out_w):
    """Bilinear resize (NCHW, align_corners=True) via separable matmuls (MXU),
    replacing the previous 4-way gather formulation."""
    _, _, H, W = x.shape
    a_h = _interp_matrix(out_h, H)                       # (out_h, H)
    a_w = _interp_matrix(out_w, W)                       # (out_w, W)
    t = jnp.einsum("oh,nchw->ncow", a_h, x)
    return jnp.einsum("pw,ncow->ncop", a_w, t)


def maxpool2_nhwc(t):
    n, H, W, C = t.shape
    return t.reshape(n, H // 2, 2, W // 2, 2, C).max(axis=(2, 4))


# --------------------------------------------------------------------------
# MTUR forward
# --------------------------------------------------------------------------
@jax.jit
def mtur_forward(x, depth_map, params):
    n, c, h, w = x.shape
    c2 = c // 2
    h4, w4 = h // 4, w // 4
    h8, w8 = h // 8, w // 8
    L1 = h4 * w4
    L2 = h8 * w8

    # `down`: depthwise 4x4 stride-4 conv with every weight == 1/16  ==  4x4 avg pool.
    x_down = x.reshape(n, c, h4, 4, w4, 4).mean(axis=(3, 5))      # (n, c, h4, w4)

    # Fused theta/phi/g 1x1 conv as ONE tiled matmul (bf16 operands, f32 acc).
    xd_flat = x_down.transpose(0, 2, 3, 1).reshape(n * L1, c).astype(jnp.bfloat16)
    w_qkv = jnp.concatenate(
        [params["w_theta"], params["w_phi"], params["w_g"]], axis=1
    ).astype(jnp.bfloat16)                                        # (c, 3*c2)
    b_qkv = jnp.concatenate(
        [params["b_theta"], params["b_phi"], params["b_g"]], axis=0
    ).astype(jnp.float32)                                         # (3*c2,)
    qkv = fused_conv1x1(xd_flat, w_qkv, b_qkv)                    # (n*L1, 3*c2) bf16
    theta_f, phi_f, g_f = jnp.split(qkv, 3, axis=-1)

    theta = theta_f.reshape(n, L1, c2)                            # (n, L1, c2)
    phi_pooled = maxpool2_nhwc(phi_f.reshape(n, h4, w4, c2))      # (n, h8, w8, c2)
    g_pooled = maxpool2_nhwc(g_f.reshape(n, h4, w4, c2))
    # Pre-transpose phi so the in-kernel score matmul is a plain NN dot.
    phi_t = phi_pooled.reshape(n, L2, c2).transpose(0, 2, 1)      # (n, c2, L2)
    g_mat = g_pooled.reshape(n, L2, c2)                           # (n, L2, c2)

    # Depth maps resized with align_corners=True bilinear (matmul form, f32).
    depth1 = bilinear_ac(depth_map, h4, w4).reshape(n, L1, 1)
    depth2 = bilinear_ac(depth_map, h8, w8).reshape(n, 1, L2)

    # Attention + fused z 1x1 conv in Pallas -> (n, L1, c) f32.
    w_z = params["w_z"].astype(jnp.bfloat16)
    b_z = params["b_z"].astype(jnp.float32)
    z_flat = mtur_attention_z(theta, phi_t, g_mat, depth1, depth2, w_z, b_z)

    z_img = z_flat.reshape(n, h4, w4, c).transpose(0, 3, 1, 2)    # (n, c, h4, w4)

    # Final bilinear upsample (align_corners=True, matmul form) + residual.
    return x + bilinear_ac(z_img, h, w)


def init_params(key, in_channels):
    c = in_channels
    c2 = c // 2
    ks = jax.random.split(key, 8)
    scale = 0.1
    # 1x1 conv weights stored as (Cin, Cout)  (== torch weight[:, :, 0, 0].T)
    return {
        "w_theta": scale * jax.random.normal(ks[0], (c, c2), jnp.float32),
        "b_theta": scale * jax.random.normal(ks[1], (c2,), jnp.float32),
        "w_phi": scale * jax.random.normal(ks[2], (c, c2), jnp.float32),
        "b_phi": scale * jax.random.normal(ks[3], (c2,), jnp.float32),
        "w_g": scale * jax.random.normal(ks[4], (c, c2), jnp.float32),
        "b_g": scale * jax.random.normal(ks[5], (c2,), jnp.float32),
        "w_z": scale * jax.random.normal(ks[6], (c2, c), jnp.float32),
        "b_z": scale * jax.random.normal(ks[7], (c,), jnp.float32),
        # `down` weights are fixed to 1/16 in the PyTorch __init__ -> exact avg pool.
    }


if __name__ == "__main__":
    key = jax.random.PRNGKey(0)
    k_x, k_d, k_p = jax.random.split(key, 3)

    n, c, h, w = 2, 16, 32, 32
    x = jax.random.normal(k_x, (n, c, h, w), jnp.float32)
    depth_map = jax.nn.sigmoid(jax.random.normal(k_d, (n, 1, h, w), jnp.float32))
    params = init_params(k_p, c)

    out = mtur_forward(x, depth_map, params)
    jax.block_until_ready(out)
    assert out.shape == (n, c, h, w) and out.dtype == jnp.float32
    assert bool(jnp.all(jnp.isfinite(out)))
    print("KERNEL_OK")
</pallas_src>

<mosaic_0001>
module attributes {stable_mosaic.version = 11 : i64} {
  func.func @_fused_conv1x1_kernel(%arg0: i32, %arg1: memref<128x16xbf16, #tpu.memory_space<vmem>>, %arg2: memref<16x24xbf16, #tpu.memory_space<vmem>>, %arg3: memref<1x24xf32, #tpu.memory_space<vmem>>, %arg4: memref<128x24xbf16, #tpu.memory_space<vmem>>) attributes {dimension_semantics = [#tpu.dimension_semantics<parallel>], iteration_bounds = array<i64: 1>, scalar_prefetch = 0 : i64, scratch_operands = 0 : i64, tpu.core_type = #tpu.core_type<tc>, window_params = [{transform_indices = @transform_0, window_bounds = array<i64: 128, 16>}, {pipeline_mode = #tpu.pipeline_mode<synchronous>, transform_indices = @transform_1, window_bounds = array<i64: 16, 24>}, {pipeline_mode = #tpu.pipeline_mode<synchronous>, transform_indices = @transform_2, window_bounds = array<i64: 1, 24>}, {transform_indices = @transform_3, window_bounds = array<i64: 128, 24>}]} {
    %c0 = arith.constant 0 : index
    %c0_0 = arith.constant 0 : index
    %0 = vector.load %arg1[%c0, %c0_0] : memref<128x16xbf16, #tpu.memory_space<vmem>>, vector<128x16xbf16>
    %c0_1 = arith.constant 0 : index
    %c0_2 = arith.constant 0 : index
    %1 = vector.load %arg2[%c0_1, %c0_2] : memref<16x24xbf16, #tpu.memory_space<vmem>>, vector<16x24xbf16>
    %cst = arith.constant dense<0.000000e+00> : vector<128x24xf32>
    %2 = tpu.matmul %0, %1, %cst {dimension_numbers = #tpu.dot_dimension_numbers<[1], [0], [0], [1], [0, 0, 1, 1], [], []>} : vector<128x16xbf16>, vector<16x24xbf16>, vector<128x24xf32> -> vector<128x24xf32>
    %c0_3 = arith.constant 0 : index
    %c0_4 = arith.constant 0 : index
    %3 = vector.load %arg3[%c0_3, %c0_4] : memref<1x24xf32, #tpu.memory_space<vmem>>, vector<1x24xf32>
    %4 = vector.broadcast %3 : vector<1x24xf32> to vector<128x24xf32>
    %5 = arith.addf %2, %4 : vector<128x24xf32>
    %6 = arith.truncf %5 : vector<128x24xf32> to vector<128x24xbf16>
    %c0_5 = arith.constant 0 : index
    %c0_6 = arith.constant 0 : index
    %7 = vector.load %arg4[%c0_5, %c0_6] : memref<128x24xbf16, #tpu.memory_space<vmem>>, vector<128x24xbf16>
    tpu.vector_store %arg4[%c0_5, %c0_6], %6 {strides = array<i32>} : memref<128x24xbf16, #tpu.memory_space<vmem>>, vector<128x24xbf16>,
    return
  }
  func.func @transform_0(%arg0: i32) -> (i32, i32) {
    %c0_i32 = arith.constant 0 : i32
    %c0_i32_0 = arith.constant 0 : i32
    return %arg0, %c0_i32 : i32, i32
  }
  func.func @transform_1(%arg0: i32) -> (i32, i32) {
    %c0_i32 = arith.constant 0 : i32
    %c0_i32_0 = arith.constant 0 : i32
    %c0_i32_1 = arith.constant 0 : i32
    return %c0_i32, %c0_i32_0 : i32, i32
  }
  func.func @transform_2(%arg0: i32) -> (i32, i32) {
    %c0_i32 = arith.constant 0 : i32
    %c0_i32_0 = arith.constant 0 : i32
    %c0_i32_1 = arith.constant 0 : i32
    return %c0_i32, %c0_i32_0 : i32, i32
  }
  func.func @transform_3(%arg0: i32) -> (i32, i32) {
    %c0_i32 = arith.constant 0 : i32
    %c0_i32_0 = arith.constant 0 : i32
    return %arg0, %c0_i32 : i32, i32
  }
}

module attributes {stable_mosaic.version = 11 : i64} {
  func.func @_attn_z_kernel(%arg0: i32, %arg1: i32, %arg2: memref<1x64x8xbf16, #tpu.memory_space<vmem>>, %arg3: memref<1x8x16xbf16, #tpu.memory_space<vmem>>, %arg4: memref<1x16x8xbf16, #tpu.memory_space<vmem>>, %arg5: memref<1x64x1xf32, #tpu.memory_space<vmem>>, %arg6: memref<1x1x16xf32, #tpu.memory_space<vmem>>, %arg7: memref<8x16xbf16, #tpu.memory_space<vmem>>, %arg8: memref<1x16xf32, #tpu.memory_space<vmem>>, %arg9: memref<1x64x16xf32, #tpu.memory_space<vmem>>) attributes {dimension_semantics = [#tpu.dimension_semantics<parallel>, #tpu.dimension_semantics<parallel>], iteration_bounds = array<i64: 2, 1>, scalar_prefetch = 0 : i64, scratch_operands = 0 : i64, tpu.core_type = #tpu.core_type<tc>, window_params = [{transform_indices = @transform_0, window_bounds = array<i64: 1, 64, 8>}, {transform_indices = @transform_1, window_bounds = array<i64: 1, 8, 16>}, {transform_indices = @transform_2, window_bounds = array<i64: 1, 16, 8>}, {transform_indices = @transform_3, window_bounds = array<i64: 1, 64, 1>}, {transform_indices = @transform_4, window_bounds = array<i64: 1, 1, 16>}, {pipeline_mode = #tpu.pipeline_mode<synchronous>, transform_indices = @transform_5, window_bounds = array<i64: 8, 16>}, {pipeline_mode = #tpu.pipeline_mode<synchronous>, transform_indices = @transform_6, window_bounds = array<i64: 1, 16>}, {transform_indices = @transform_7, window_bounds = array<i64: 1, 64, 16>}]} {
    %c0 = arith.constant 0 : index
    %c0_0 = arith.constant 0 : index
    %c0_1 = arith.constant 0 : index
    %0 = vector.load %arg2[%c0, %c0_0, %c0_1] : memref<1x64x8xbf16, #tpu.memory_space<vmem>>, vector<1x64x8xbf16>
    %1 = vector.shape_cast %0 : vector<1x64x8xbf16> to vector<64x8xbf16>
    %c0_2 = arith.constant 0 : index
    %c0_3 = arith.constant 0 : index
    %c0_4 = arith.constant 0 : index
    %2 = vector.load %arg3[%c0_2, %c0_3, %c0_4] : memref<1x8x16xbf16, #tpu.memory_space<vmem>>, vector<1x8x16xbf16>
    %3 = vector.shape_cast %2 : vector<1x8x16xbf16> to vector<8x16xbf16>
    %c0_5 = arith.constant 0 : index
    %c0_6 = arith.constant 0 : index
    %c0_7 = arith.constant 0 : index
    %4 = vector.load %arg4[%c0_5, %c0_6, %c0_7] : memref<1x16x8xbf16, #tpu.memory_space<vmem>>, vector<1x16x8xbf16>
    %5 = vector.shape_cast %4 : vector<1x16x8xbf16> to vector<16x8xbf16>
    %c0_8 = arith.constant 0 : index
    %c0_9 = arith.constant 0 : index
    %c0_10 = arith.constant 0 : index
    %6 = vector.load %arg5[%c0_8, %c0_9, %c0_10] : memref<1x64x1xf32, #tpu.memory_space<vmem>>, vector<1x64x1xf32>
    %7 = vector.shape_cast %6 : vector<1x64x1xf32> to vector<64x1xf32>
    %c0_11 = arith.constant 0 : index
    %c0_12 = arith.constant 0 : index
    %c0_13 = arith.constant 0 : index
    %8 = vector.load %arg6[%c0_11, %c0_12, %c0_13] : memref<1x1x16xf32, #tpu.memory_space<vmem>>, vector<1x1x16xf32>
    %9 = vector.shape_cast %8 : vector<1x1x16xf32> to vector<1x16xf32>
    %cst = arith.constant dense<0.000000e+00> : vector<64x16xf32>
    %10 = tpu.matmul %1, %3, %cst {dimension_numbers = #tpu.dot_dimension_numbers<[1], [0], [0], [1], [0, 0, 1, 1], [], []>} : vector<64x8xbf16>, vector<8x16xbf16>, vector<64x16xf32> -> vector<64x16xf32>
    %cst_14 = arith.constant dense<0xFF800000> : vector<64xf32>
    %11 = vector.multi_reduction <maximumf>, %10, %cst_14 [1] : vector<64x16xf32> to vector<64xf32>
    %12 = vector.shape_cast %11 : vector<64xf32> to vector<64x1xf32>
    %13 = vector.broadcast %12 : vector<64x1xf32> to vector<64x16xf32>
    %14 = arith.subf %10, %13 : vector<64x16xf32>
    %15 = math.exp %14 : vector<64x16xf32>
    %cst_15 = arith.constant dense<0.000000e+00> : vector<64xf32>
    %16 = vector.multi_reduction <add>, %15, %cst_15 [1] : vector<64x16xf32> to vector<64xf32>
    %17 = vector.shape_cast %16 : vector<64xf32> to vector<64x1xf32>
    %18 = tpu.reciprocal %17 {approx = true} : vector<64x1xf32> -> vector<64x1xf32>
    %cst_16 = arith.constant 9.99999997E-7 : f32
    %19 = vector.broadcast %cst_16 : f32 to vector<64x1xf32>
    %20 = arith.addf %7, %19 : vector<64x1xf32>
    %21 = tpu.reciprocal %20 {approx = true} : vector<64x1xf32> -> vector<64x1xf32>
    %cst_17 = arith.constant 9.99999997E-7 : f32
    %22 = vector.broadcast %cst_17 : f32 to vector<1x16xf32>
    %23 = arith.addf %9, %22 : vector<1x16xf32>
    %24 = tpu.reciprocal %23 {approx = true} : vector<1x16xf32> -> vector<1x16xf32>
    %25 = vector.broadcast %7 : vector<64x1xf32> to vector<64x16xf32>
    %26 = vector.broadcast %24 : vector<1x16xf32> to vector<64x16xf32>
    %27 = arith.mulf %25, %26 : vector<64x16xf32>
    %28 = vector.broadcast %9 : vector<1x16xf32> to vector<64x16xf32>
    %29 = vector.broadcast %21 : vector<64x1xf32> to vector<64x16xf32>
    %30 = arith.mulf %28, %29 : vector<64x16xf32>
    %31 = arith.minimumf %27, %30 : vector<64x16xf32>
    %32 = math.exp %31 : vector<64x16xf32>
    %cst_18 = arith.constant dense<0.000000e+00> : vector<64xf32>
    %33 = vector.multi_reduction <add>, %32, %cst_18 [1] : vector<64x16xf32> to vector<64xf32>
    %34 = vector.shape_cast %33 : vector<64xf32> to vector<64x1xf32>
    %35 = tpu.reciprocal %34 {approx = true} : vector<64x1xf32> -> vector<64x1xf32>
    %36 = arith.mulf %15, %32 : vector<64x16xf32>
    %37 = arith.mulf %18, %35 : vector<64x1xf32>
    %38 = vector.broadcast %37 : vector<64x1xf32> to vector<64x16xf32>
    %39 = arith.mulf %36, %38 : vector<64x16xf32>
    %40 = math.exp %39 : vector<64x16xf32>
    %cst_19 = arith.constant dense<0.000000e+00> : vector<64xf32>
    %41 = vector.multi_reduction <add>, %40, %cst_19 [1] : vector<64x16xf32> to vector<64xf32>
    %42 = vector.shape_cast %41 : vector<64xf32> to vector<64x1xf32>
    %43 = tpu.reciprocal %42 {approx = true} : vector<64x1xf32> -> vector<64x1xf32>
    %44 = vector.broadcast %43 : vector<64x1xf32> to vector<64x16xf32>
    %45 = arith.mulf %40, %44 : vector<64x16xf32>
    %46 = arith.truncf %45 : vector<64x16xf32> to vector<64x16xbf16>
    %cst_20 = arith.constant dense<0.000000e+00> : vector<64x8xf32>
    %47 = tpu.matmul %46, %5, %cst_20 {dimension_numbers = #tpu.dot_dimension_numbers<[1], [0], [0], [1], [0, 0, 1, 1], [], []>} : vector<64x16xbf16>, vector<16x8xbf16>, vector<64x8xf32> -> vector<64x8xf32>
    %48 = arith.truncf %47 : vector<64x8xf32> to vector<64x8xbf16>
    %c0_21 = arith.constant 0 : index
    %c0_22 = arith.constant 0 : index
    %49 = vector.load %arg7[%c0_21, %c0_22] : memref<8x16xbf16, #tpu.memory_space<vmem>>, vector<8x16xbf16>
    %cst_23 = arith.constant dense<0.000000e+00> : vector<64x16xf32>
    %50 = tpu.matmul %48, %49, %cst_23 {dimension_numbers = #tpu.dot_dimension_numbers<[1], [0], [0], [1], [0, 0, 1, 1], [], []>} : vector<64x8xbf16>, vector<8x16xbf16>, vector<64x16xf32> -> vector<64x16xf32>
    %c0_24 = arith.constant 0 : index
    %c0_25 = arith.constant 0 : index
    %51 = vector.load %arg8[%c0_24, %c0_25] : memref<1x16xf32, #tpu.memory_space<vmem>>, vector<1x16xf32>
    %52 = vector.broadcast %51 : vector<1x16xf32> to vector<64x16xf32>
    %53 = arith.addf %50, %52 : vector<64x16xf32>
    %c0_26 = arith.constant 0 : index
    %c0_27 = arith.constant 0 : index
    %c0_28 = arith.constant 0 : index
    %54 = vector.load %arg9[%c0_26, %c0_27, %c0_28] : memref<1x64x16xf32, #tpu.memory_space<vmem>>, vector<1x64x16xf32>
    %55 = vector.shape_cast %54 : vector<1x64x16xf32> to vector<64x16xf32>
    %56 = vector.shape_cast %53 : vector<64x16xf32> to vector<1x64x16xf32>
    tpu.vector_store %arg9[%c0_26, %c0_27, %c0_28], %56 {strides = array<i32>} : memref<1x64x16xf32, #tpu.memory_space<vmem>>, vector<1x64x16xf32>,
    return
  }
  func.func @transform_0(%arg0: i32, %arg1: i32) -> (i32, i32, i32) {
    %c0_i32 = arith.constant 0 : i32
    %c0_i32_0 = arith.constant 0 : i32
    return %arg0, %arg1, %c0_i32 : i32, i32, i32
  }
  func.func @transform_1(%arg0: i32, %arg1: i32) -> (i32, i32, i32) {
    %c0_i32 = arith.constant 0 : i32
    %c0_i32_0 = arith.constant 0 : i32
    %c0_i32_1 = arith.constant 0 : i32
    return %arg0, %c0_i32, %c0_i32_0 : i32, i32, i32
  }
  func.func @transform_2(%arg0: i32, %arg1: i32) -> (i32, i32, i32) {
    %c0_i32 = arith.constant 0 : i32
    %c0_i32_0 = arith.constant 0 : i32
    %c0_i32_1 = arith.constant 0 : i32
    return %arg0, %c0_i32, %c0_i32_0 : i32, i32, i32
  }
  func.func @transform_3(%arg0: i32, %arg1: i32) -> (i32, i32, i32) {
    %c0_i32 = arith.constant 0 : i32
    %c0_i32_0 = arith.constant 0 : i32
    return %arg0, %arg1, %c0_i32 : i32, i32, i32
  }
  func.func @transform_4(%arg0: i32, %arg1: i32) -> (i32, i32, i32) {
    %c0_i32 = arith.constant 0 : i32
    %c0_i32_0 = arith.constant 0 : i32
    %c0_i32_1 = arith.constant 0 : i32
    return %arg0, %c0_i32, %c0_i32_0 : i32, i32, i32
  }
  func.func @transform_5(%arg0: i32, %arg1: i32) -> (i32, i32) {
    %c0_i32 = arith.constant 0 : i32
    %c0_i32_0 = arith.constant 0 : i32
    %c0_i32_1 = arith.constant 0 : i32
    return %c0_i32, %c0_i32_0 : i32, i32
  }
  func.func @transform_6(%arg0: i32, %arg1: i32) -> (i32, i32) {
    %c0_i32 = arith.constant 0 : i32
    %c0_i32_0 = arith.constant 0 : i32
    %c0_i32_1 = arith.constant 0 : i32
    return %c0_i32, %c0_i32_0 : i32, i32
  }
  func.func @transform_7(%arg0: i32, %arg1: i32) -> (i32, i32, i32) {
    %c0_i32 = arith.constant 0 : i32
    %c0_i32_0 = arith.constant 0 : i32
    return %arg0, %arg1, %c0_i32 : i32, i32, i32
  }
}

</mosaic_0001>

<llo_original>
// kernel: mtur_forward.2
$region0: #{mtur_forward.2}
  #allocation0 [shape = 'u32[]', space=smem, size = 0x4, offset = 0x4, fixed_abs, tag = 'smem constant byte address 0x4 - core index']
  #allocation1 [shape = 'u32[144,128]{1,0:T(1,128)}', space=vmem, size = 0x12000, scoped, tag = 'internal scratch']
  %s0 = inlined_call_operand.vmem [shape: bf16[128,16], index: 0, kind: input, shape index: {}]
  %s1 = inlined_call_operand.vmem [shape: bf16[16,24], index: 1, kind: input, shape index: {}]
  %s2 = inlined_call_operand.vmem [shape: f32[1,24], index: 2, kind: input, shape index: {}]
  %s3 = inlined_call_operand.vmem [shape: bf16[128,24], index: 3, kind: output, shape index: {}]
  %s4 = sld [smem:[#allocation0]]
  $region22: #{mtur_forward.2} parent=0
    _
  %s6 = ssub.s32 1, %s4
  %s7 = scalar_select 0, %s6, %s4
  // Predicated region
  $region2: #{mtur_forward.2} parent=0 // pred_check
    _
  $region3: #{mtur_forward.2} parent=0 // pred_check_branch
    %9 = sbr.rel (0) target = $region5
  $region4: #{mtur_forward.2} parent=0 // pred_region
    _
  $region5: #{mtur_forward.2} parent=0 // pred_fallthru
    _
  // Predicated region
  $region6: #{mtur_forward.2} parent=0 // pred_check
    _
  $region7: #{mtur_forward.2} parent=0 // pred_check_branch
    %11 = sbr.rel (0) target = $region9
  $region8: #{mtur_forward.2} parent=0 // pred_region
    _
  $region9: #{mtur_forward.2} parent=0 // pred_fallthru
    _
  // Predicated region
  $region10: #{mtur_forward.2} parent=0 // pred_check
    _
  $region11: #{mtur_forward.2} parent=0 // pred_check_branch
    %13 = sbr.rel (0) target = $region13
  $region12: #{mtur_forward.2} parent=0 // pred_region
    _
  $region13: #{mtur_forward.2} parent=0 // pred_fallthru
    _
  %v15 = vld [vmem:[%s0] sm:$0xf]
  %v16 = vld [vmem:[%s0 + $0x4] sm:$0xf]
  %v17 = vld [vmem:[%s0 + $0x8] sm:$0xf]
  %v18 = vld [vmem:[%s0 + $0xc] sm:$0xf]
  %v19 = vld [vmem:[%s0 + $0x10] sm:$0xf]
  %v20 = vld [vmem:[%s0 + $0x14] sm:$0xf]
  %v21 = vld [vmem:[%s0 + $0x18] sm:$0xf]
  %v22 = vld [vmem:[%s0 + $0x1c] sm:$0xf]
  %v23 = vld [vmem:[%s0 + $0x20] sm:$0xf]
  %v24 = vld [vmem:[%s0 + $0x24] sm:$0xf]
  %v25 = vld [vmem:[%s0 + $0x28] sm:$0xf]
  %v26 = vld [vmem:[%s0 + $0x2c] sm:$0xf]
  %v27 = vld [vmem:[%s0 + $0x30] sm:$0xf]
  %v28 = vld [vmem:[%s0 + $0x34] sm:$0xf]
  %v29 = vld [vmem:[%s0 + $0x38] sm:$0xf]
  %v30 = vld [vmem:[%s0 + $0x3c] sm:$0xf]
  %v31 = vld [vmem:[%s1] sm:$0xf]
  %v32 = vld [vmem:[%s1 + $0x4] sm:$0xf]
  %v33 = vld [vmem:[%s2] sm:$0x1]
  %v35 = vlaneseq
  %v36 = vshrl.u32 %v35, 7
  %v37 = vsub.s32 0, %v36
  %v38 = vrot.slane %v33, %v37
  %v56 = vunpack.c.l.b16 %v15
  %v57 = vunpack.c.l.b16 %v16
  %v58 = vunpack.c.l.b16 %v17
  %v59 = vunpack.c.l.b16 %v18
  %v60 = vunpack.c.l.b16 %v19
  %v61 = vunpack.c.l.b16 %v20
  %v62 = vunpack.c.l.b16 %v21
  %v63 = vunpack.c.l.b16 %v22
  %v64 = vunpack.c.l.b16 %v23
  %v65 = vunpack.c.l.b16 %v24
  %v66 = vunpack.c.l.b16 %v25
  %v67 = vunpack.c.l.b16 %v26
  %v68 = vunpack.c.l.b16 %v27
  %v69 = vunpack.c.l.b16 %v28
  %v70 = vunpack.c.l.b16 %v29
  %v71 = vunpack.c.l.b16 %v30
  %v72 = vpack.c.b16 %v57, %v56
  %v73 = vpack.c.b16 %v59, %v58
  %v74 = vpack.c.b16 %v61, %v60
  %v75 = vpack.c.b16 %v63, %v62
  %v76 = vpack.c.b16 %v65, %v64
  %v77 = vpack.c.b16 %v67, %v66
  %v78 = vpack.c.b16 %v69, %v68
  %v79 = vpack.c.b16 %v71, %v70
  %v82 = vunpack.c.l.b16 %v31
  %v83 = vunpack.c.l.b16 %v32
  %v84 = vpack.c.b16 %v83, %v82
  %vm86 = vcmask 130048
  %v88 = vsel %vm86, %v72, 0
  %v91 = vsel %vm86, %v73, 0
  %v94 = vsel %vm86, %v74, 0
  %v97 = vsel %vm86, %v75, 0
  %v100 = vsel %vm86, %v76, 0
  %v103 = vsel %vm86, %v77, 0
  %v106 = vsel %vm86, %v78, 0
  %v109 = vsel %vm86, %v79, 0
  %111 = vmatprep.subr.bf16.mxu0 0
  %112 = vmatpush1.bf16.msra.mxu0 0
  %113 = vmatprep.subr.bf16.mxu0 0
  %114 = vmatpush1.bf16.msra.mxu0 0
  %115 = vmatprep.subr.bf16.mxu0 0
  %116 = vmatpush1.bf16.msra.mxu0 0
  %117 = vmatprep.subr.bf16.mxu0 0
  %118 = vmatpush1.bf16.msra.mxu0 0
  %119 = vmatprep.subr.bf16.mxu0 0
  %120 = vmatpush1.bf16.msra.mxu0 0
  %121 = vmatprep.subr.bf16.mxu0 0
  %122 = vmatpush1.bf16.msra.mxu0 0
  %123 = vmatprep.subr.bf16.mxu0 0
  %124 = vmatpush1.bf16.msra.mxu0 0
  %125 = vmatprep.subr.bf16.mxu0 0
  %126 = vmatpush1.bf16.msra.mxu0 %v84
  %127 = vmatprep.subr.bf16.mxu0 0
  %128 = vmatpush2.bf16.msra.mxu0 0
  %129 = vmatprep.subr.bf16.mxu0 0
  %130 = vmatpush2.bf16.msra.mxu0 0
  %131 = vmatprep.subr.bf16.mxu0 0
  %132 = vmatpush2.bf16.msra.mxu0 0
  %133 = vmatprep.subr.bf16.mxu0 0
  %134 = vmatpush2.bf16.msra.mxu0 0
  %135 = vmatprep.subr.bf16.mxu0 0
  %136 = vmatpush2.bf16.msra.mxu0 0
  %137 = vmatprep.subr.bf16.mxu0 0
  %138 = vmatpush2.bf16.msra.mxu0 0
  %139 = vmatprep.subr.bf16.mxu0 0
  %140 = vmatpush2.bf16.msra.mxu0 0
  %141 = vmatprep.subr.bf16.mxu0 0
  %142 = vmatpush2.bf16.msra.mxu0 0
  %143 = vmatprep.mubr.bf16.mxu0 0
  %144 = vmatmul.mubr.bf16.gmra.mxu0 %v88
  %v145 = vpop.f32.mrf.mxu0
  %v146 = vadd.f32 %v38, %v145
  %v147 = vpop.f32.mrf.mxu0
  %v148 = vpop.f32.mrf.mxu0
  %v149 = vadd.f32 %v38, %v148
  %v150 = vpop.f32.mrf.mxu0
  %151 = vmatprep.mubr.bf16.mxu0 0
  %152 = vmatmul.mubr.bf16.gmra.mxu0 %v91
  %v153 = vpop.f32.mrf.mxu0
  %v154 = vadd.f32 %v38, %v153
  %v155 = vpop.f32.mrf.mxu0
  %v156 = vpop.f32.mrf.mxu0
  %v157 = vadd.f32 %v38, %v156
  %v158 = vpop.f32.mrf.mxu0
  %159 = vmatprep.mubr.bf16.mxu0 0
  %160 = vmatmul.mubr.bf16.gmra.mxu0 %v94
  %v161 = vpop.f32.mrf.mxu0
  %v162 = vadd.f32 %v38, %v161
  %v163 = vpop.f32.mrf.mxu0
  %v164 = vpop.f32.mrf.mxu0
  %v165 = vadd.f32 %v38, %v164
  %v166 = vpop.f32.mrf.mxu0
  %167 = vmatprep.mubr.bf16.mxu0 0
  %168 = vmatmul.mubr.bf16.gmra.mxu0 %v97
  %v169 = vpop.f32.mrf.mxu0
  %v170 = vadd.f32 %v38, %v169
  %v171 = vpop.f32.mrf.mxu0
  %v172 = vpop.f32.mrf.mxu0
  %v173 = vadd.f32 %v38, %v172
  %v174 = vpop.f32.mrf.mxu0
  %175 = vmatprep.mubr.bf16.mxu0 0
  %176 = vmatmul.mubr.bf16.gmra.mxu0 %v100
  %v177 = vpop.f32.mrf.mxu0
  %v178 = vadd.f32 %v38, %v177
  %v179 = vpop.f32.mrf.mxu0
  %v180 = vpop.f32.mrf.mxu0
  %v181 = vadd.f32 %v38, %v180
  %v182 = vpop.f32.mrf.mxu0
  %183 = vmatprep.mubr.bf16.mxu0 0
  %184 = vmatmul.mubr.bf16.gmra.mxu0 %v103
  %v185 = vpop.f32.mrf.mxu0
  %v186 = vadd.f32 %v38, %v185
  %v187 = vpop.f32.mrf.mxu0
  %v188 = vpop.f32.mrf.mxu0
  %v189 = vadd.f32 %v38, %v188
  %v190 = vpop.f32.mrf.mxu0
  %191 = vmatprep.mubr.bf16.mxu0 0
  %192 = vmatmul.mubr.bf16.gmra.mxu0 %v106
  %v193 = vpop.f32.mrf.mxu0
  %v194 = vadd.f32 %v38, %v193
  %v195 = vpop.f32.mrf.mxu0
  %v196 = vpop.f32.mrf.mxu0
  %v197 = vadd.f32 %v38, %v196
  %v198 = vpop.f32.mrf.mxu0
  %199 = vmatprep.mubr.bf16.mxu0 0
  %200 = vmatmul.mubr.bf16.gmra.mxu0 %v109
  %v201 = vpop.f32.mrf.mxu0
  %v202 = vadd.f32 %v38, %v201
  %v203 = vpop.f32.mrf.mxu0
  %v204 = vpop.f32.mrf.mxu0
  %v205 = vadd.f32 %v38, %v204
  %v206 = vpop.f32.mrf.mxu0
  %207 = vdwg.mxu0
  %v208 = vpack.c.bf16 %v149, %v146
  %v209 = vpack.c.bf16 %v157, %v154
  %v210 = vpack.c.bf16 %v165, %v162
  %v211 = vpack.c.bf16 %v173, %v170
  %v212 = vpack.c.bf16 %v181, %v178
  %v213 = vpack.c.bf16 %v189, %v186
  %v214 = vpack.c.bf16 %v197, %v194
  %v215 = vpack.c.bf16 %v205, %v202
  %v224 = vunpack.c.l.b16 %v208
  %v225 = vunpack.c.h.b16 %v208
  %v226 = vunpack.c.l.b16 %v209
  %v227 = vunpack.c.h.b16 %v209
  %v228 = vunpack.c.l.b16 %v210
  %v229 = vunpack.c.h.b16 %v210
  %v230 = vunpack.c.l.b16 %v211
  %v231 = vunpack.c.h.b16 %v211
  %v232 = vunpack.c.l.b16 %v212
  %v233 = vunpack.c.h.b16 %v212
  %v234 = vunpack.c.l.b16 %v213
  %v235 = vunpack.c.h.b16 %v213
  %v236 = vunpack.c.l.b16 %v214
  %v237 = vunpack.c.h.b16 %v214
  %v238 = vunpack.c.l.b16 %v215
  %v239 = vunpack.c.h.b16 %v215
  %v240 = vpack.c.b16 %v224, %v224
  %v241 = vpack.c.b16 %v225, %v225
  %v242 = vpack.c.b16 %v226, %v226
  %v243 = vpack.c.b16 %v227, %v227
  %v244 = vpack.c.b16 %v228, %v228
  %v245 = vpack.c.b16 %v229, %v229
  %v246 = vpack.c.b16 %v230, %v230
  %v247 = vpack.c.b16 %v231, %v231
  %v248 = vpack.c.b16 %v232, %v232
  %v249 = vpack.c.b16 %v233, %v233
  %v250 = vpack.c.b16 %v234, %v234
  %v251 = vpack.c.b16 %v235, %v235
  %v252 = vpack.c.b16 %v236, %v236
  %v253 = vpack.c.b16 %v237, %v237
  %v254 = vpack.c.b16 %v238, %v238
  %v255 = vpack.c.b16 %v239, %v239
  %vm272 = vcmask 191488
  %273 = vst.msk [vmem:[%s3] sm:$0xf] %vm272, %v240
  %274 = vst.msk [vmem:[%s3 + $0x4] sm:$0xf] %vm272, %v241
  %275 = vst.msk [vmem:[%s3 + $0x8] sm:$0xf] %vm272, %v242
  %276 = vst.msk [vmem:[%s3 + $0xc] sm:$0xf] %vm272, %v243
  %277 = vst.msk [vmem:[%s3 + $0x10] sm:$0xf] %vm272, %v244
  %278 = vst.msk [vmem:[%s3 + $0x14] sm:$0xf] %vm272, %v245
  %279 = vst.msk [vmem:[%s3 + $0x18] sm:$0xf] %vm272, %v246
  %280 = vst.msk [vmem:[%s3 + $0x1c] sm:$0xf] %vm272, %v247
  %281 = vst.msk [vmem:[%s3 + $0x20] sm:$0xf] %vm272, %v248
  %282 = vst.msk [vmem:[%s3 + $0x24] sm:$0xf] %vm272, %v249
  %283 = vst.msk [vmem:[%s3 + $0x28] sm:$0xf] %vm272, %v250
  %284 = vst.msk [vmem:[%s3 + $0x2c] sm:$0xf] %vm272, %v251
  %285 = vst.msk [vmem:[%s3 + $0x30] sm:$0xf] %vm272, %v252
  %286 = vst.msk [vmem:[%s3 + $0x34] sm:$0xf] %vm272, %v253
  %287 = vst.msk [vmem:[%s3 + $0x38] sm:$0xf] %vm272, %v254
  %288 = vst.msk [vmem:[%s3 + $0x3c] sm:$0xf] %vm272, %v255
  // Predicated region
  $region14: #{mtur_forward.2} parent=0 // pred_check
    _
  $region15: #{mtur_forward.2} parent=0 // pred_check_branch
    %290 = sbr.rel (0) target = $region17
  $region16: #{mtur_forward.2} parent=0 // pred_region
    _
  $region17: #{mtur_forward.2} parent=0 // pred_fallthru
    _
  // Predicated region
  $region18: #{mtur_forward.2} parent=0 // pred_check
    _
  $region19: #{mtur_forward.2} parent=0 // pred_check_branch
    %292 = sbr.rel (0) target = $region21
  $region20: #{mtur_forward.2} parent=0 // pred_region
    _
  $region21: #{mtur_forward.2} parent=0 // pred_fallthru
    _

// kernel: mtur_forward.3
$region0: #{mtur_forward.3}
  #allocation0 [shape = 'u32[]', space=smem, size = 0x4, offset = 0x4, fixed_abs, tag = 'smem constant byte address 0x4 - core index']
  #allocation1 [shape = 'u32[144,128]{1,0:T(1,128)}', space=vmem, size = 0x12000, scoped, tag = 'internal scratch']
  %s0 = inlined_call_operand.vmem [shape: bf16[2,64,8], index: 0, kind: input, shape index: {}]
  %s1 = inlined_call_operand.vmem [shape: bf16[2,8,16], index: 1, kind: input, shape index: {}]
  %s2 = inlined_call_operand.vmem [shape: bf16[2,16,8], index: 2, kind: input, shape index: {}]
  %s3 = inlined_call_operand.vmem [shape: f32[2,64,1], index: 3, kind: input, shape index: {}]
  %s4 = inlined_call_operand.vmem [shape: f32[2,1,16], index: 4, kind: input, shape index: {}]
  %s5 = inlined_call_operand.vmem [shape: bf16[8,16], index: 5, kind: input, shape index: {}]
  %s6 = inlined_call_operand.vmem [shape: f32[1,16], index: 6, kind: input, shape index: {}]
  %s7 = inlined_call_operand.vmem [shape: f32[2,64,16], index: 7, kind: output, shape index: {}]
  %s8 = sld [smem:[#allocation0]]
  $region61: #{mtur_forward.3} parent=0
    _
  %s10 = ssub.s32 1, %s8
  %s11 = scalar_select 0, %s10, %s8
  loop: start=0, step=1, limit=4
  $region2: #{mtur_forward.3} parent=0 // loop_pre_header
    _
  $region3: #{mtur_forward.3} parent=0 // loop_header
    %s13 = sphi 0, %s17
    %p14 = scmp.ge.s32.totalorder %s13, 4
    %s20 = sphi 0, %s32
    %s21 = sphi 0, %s28
    %s22 = sphi 0, %s20
    %s23 = sphi 0, %s21
    %s24 = sphi 0, %s22
    %s25 = sphi 0, %s23
    %s37 = sphi 0, %s39
    %s40 = sphi 0, %s37
    %s41 = sphi 0, %s40
    %s57 = sphi 0, %s41
    %s63 = sphi 0, %s65
    %s66 = sphi 0, %s63
    %s67 = sphi 0, %s66
    %s83 = sphi 0, %s67
    %s89 = sphi 0, %s91
    %s92 = sphi 0, %s89
    %s93 = sphi 0, %s92
    %s109 = sphi 0, %s93
    %s117 = sphi 0, %s119
    %s120 = sphi 0, %s117
    %s121 = sphi 0, %s120
    %s137 = sphi 0, %s121
    %s143 = sphi 0, %s145
    %s146 = sphi 0, %s143
    %s147 = sphi 0, %s146
    %s163 = sphi 0, %s147
    %s167 = sphi 0, %s167
    %s169 = sphi 0, %s167
    %s170 = sphi 0, %s169
    %s184 = sphi 0, %s170
    %s188 = sphi 0, %s188
    %s190 = sphi 0, %s188
    %s191 = sphi 0, %s190
    %s205 = sphi 0, %s191
    %s213 = sphi 0, %s215
    %s216 = sphi 0, %s213
    %s217 = sphi 0, %s216
    %s233 = sphi 0, %s217
  $region4: #{mtur_forward.3} parent=0 // loop_header_branch
    %16 = sbr.rel (%p14) target = $region8
  $region5: #{mtur_forward.3} parent=0 // loop_body
    %s18 = ssub.s32 %s13, 1
    %s19 = ssub.s32 %s13, 2
    %s26 = sadd.s32 1, %s21
    %p27 = scmp.ge.s32.totalorder %s26, 1
    %s28 = scalar_select %p27, 0, %s26
    %s29 = sadd.s32 1, %s20
    %s30 = scalar_select %p27, %s29, %s20
    %p31 = scmp.ge.s32.totalorder %s30, 2
    %s32 = scalar_select %p31, 0, %s30
    %s33 = ssub.s32 %s20, %s32
    %s34 = ssub.s32 %s21, %s28
    %s35 = sor.u32 %s33, %s34
    %p36 = scmp.eq.s32.totalorder %s35, 0
    %s38 = sadd.s32 %s37, 1
    %s39 = scalar_select %p36, %s37, %s38
    %p42 = pneg %p36
    %p43 = scmp.eq.s32.totalorder %s13, 1
    %p44 = por %p42, %p43
    %p45 = scmp.ne.s32.totalorder %s37, %s40
    %p46 = scmp.eq.s32.totalorder %s13, 0
    %p47 = por %p45, %p46
    %p48 = scmp.ne.s32.totalorder %s37, %s40
    %p49 = scmp.eq.s32.totalorder %s18, 1
    %p50 = por %p48, %p49
    %p51 = scmp.ne.s32.totalorder %s40, %s41
    %p52 = scmp.eq.s32.totalorder %s18, 0
    %p53 = por %p51, %p52
    %p54 = scmp.ne.s32.totalorder %s40, %s41
    %p55 = scmp.eq.s32.totalorder %s19, 1
    %p56 = por %p54, %p55
    %p58 = scmp.ne.s32.totalorder %s41, %s57
    %p59 = scmp.eq.s32.totalorder %s19, 0
    %p60 = por %p58, %p59
    %s61 = ssub.s32 %s20, %s32
    %p62 = scmp.eq.s32.totalorder %s61, 0
    %s64 = sadd.s32 %s63, 1
    %s65 = scalar_select %p62, %s63, %s64
    %p68 = pneg %p62
    %p69 = scmp.eq.s32.totalorder %s13, 1
    %p70 = por %p68, %p69
    %p71 = scmp.ne.s32.totalorder %s63, %s66
    %p72 = scmp.eq.s32.totalorder %s13, 0
    %p73 = por %p71, %p72
    %p74 = scmp.ne.s32.totalorder %s63, %s66
    %p75 = scmp.eq.s32.totalorder %s18, 1
    %p76 = por %p74, %p75
    %p77 = scmp.ne.s32.totalorder %s66, %s67
    %p78 = scmp.eq.s32.totalorder %s18, 0
    %p79 = por %p77, %p78
    %p80 = scmp.ne.s32.totalorder %s66, %s67
    %p81 = scmp.eq.s32.totalorder %s19, 1
    %p82 = por %p80, %p81
    %p84 = scmp.ne.s32.totalorder %s67, %s83
    %p85 = scmp.eq.s32.totalorder %s19, 0
    %p86 = por %p84, %p85
    %s87 = ssub.s32 %s20, %s32
    %p88 = scmp.eq.s32.totalorder %s87, 0
    %s90 = sadd.s32 %s89, 1
    %s91 = scalar_select %p88, %s89, %s90
    %p94 = pneg %p88
    %p95 = scmp.eq.s32.totalorder %s13, 1
    %p96 = por %p94, %p95
    %p97 = scmp.ne.s32.totalorder %s89, %s92
    %p98 = scmp.eq.s32.totalorder %s13, 0
    %p99 = por %p97, %p98
    %p100 = scmp.ne.s32.totalorder %s89, %s92
    %p101 = scmp.eq.s32.totalorder %s18, 1
    %p102 = por %p100, %p101
    %p103 = scmp.ne.s32.totalorder %s92, %s93
    %p104 = scmp.eq.s32.totalorder %s18, 0
    %p105 = por %p103, %p104
    %p106 = scmp.ne.s32.totalorder %s92, %s93
    %p107 = scmp.eq.s32.totalorder %s19, 1
    %p108 = por %p106, %p107
    %p110 = scmp.ne.s32.totalorder %s93, %s109
    %p111 = scmp.eq.s32.totalorder %s19, 0
    %p112 = por %p110, %p111
    %s113 = ssub.s32 %s20, %s32
    %s114 = ssub.s32 %s21, %s28
    %s115 = sor.u32 %s113, %s114
    %p116 = scmp.eq.s32.totalorder %s115, 0
    %s118 = sadd.s32 %s117, 1
    %s119 = scalar_select %p116, %s117, %s118
    %p122 = pneg %p116
    %p123 = scmp.eq.s32.totalorder %s13, 1
    %p124 = por %p122, %p123
    %p125 = scmp.ne.s32.totalorder %s117, %s120
    %p126 = scmp.eq.s32.totalorder %s13, 0
    %p127 = por %p125, %p126
    %p128 = scmp.ne.s32.totalorder %s117, %s120
    %p129 = scmp.eq.s32.totalorder %s18, 1
    %p130 = por %p128, %p129
    %p131 = scmp.ne.s32.totalorder %s120, %s121
    %p132 = scmp.eq.s32.totalorder %s18, 0
    %p133 = por %p131, %p132
    %p134 = scmp.ne.s32.totalorder %s120, %s121
    %p135 = scmp.eq.s32.totalorder %s19, 1
    %p136 = por %p134, %p135
    %p138 = scmp.ne.s32.totalorder %s121, %s137
    %p139 = scmp.eq.s32.totalorder %s19, 0
    %p140 = por %p138, %p139
    %s141 = ssub.s32 %s20, %s32
    %p142 = scmp.eq.s32.totalorder %s141, 0
    %s144 = sadd.s32 %s143, 1
    %s145 = scalar_select %p142, %s143, %s144
    %p148 = pneg %p142
    %p149 = scmp.eq.s32.totalorder %s13, 1
    %p150 = por %p148, %p149
    %p151 = scmp.ne.s32.totalorder %s143, %s146
    %p152 = scmp.eq.s32.totalorder %s13, 0
    %p153 = por %p151, %p152
    %p154 = scmp.ne.s32.totalorder %s143, %s146
    %p155 = scmp.eq.s32.totalorder %s18, 1
    %p156 = por %p154, %p155
    %p157 = scmp.ne.s32.totalorder %s146, %s147
    %p158 = scmp.eq.s32.totalorder %s18, 0
    %p159 = por %p157, %p158
    %p160 = scmp.ne.s32.totalorder %s146, %s147
    %p161 = scmp.eq.s32.totalorder %s19, 1
    %p162 = por %p160, %p161
    %p164 = scmp.ne.s32.totalorder %s147, %s163
    %p165 = scmp.eq.s32.totalorder %s19, 0
    %p166 = por %p164, %p165
    %s168 = sadd.s32 %s167, 1
    %p171 = scmp.eq.s32.totalorder %s13, 1
    %p172 = scmp.ne.s32.totalorder %s167, %s169
    %p173 = scmp.eq.s32.totalorder %s13, 0
    %p174 = por %p172, %p173
    %p175 = scmp.ne.s32.totalorder %s167, %s169
    %p176 = scmp.eq.s32.totalorder %s18, 1
    %p177 = por %p175, %p176
    %p178 = scmp.ne.s32.totalorder %s169, %s170
    %p179 = scmp.eq.s32.totalorder %s18, 0
    %p180 = por %p178, %p179
    %p181 = scmp.ne.s32.totalorder %s169, %s170
    %p182 = scmp.eq.s32.totalorder %s19, 1
    %p183 = por %p181, %p182
    %p185 = scmp.ne.s32.totalorder %s170, %s184
    %p186 = scmp.eq.s32.totalorder %s19, 0
    %p187 = por %p185, %p186
    %s189 = sadd.s32 %s188, 1
    %p192 = scmp.eq.s32.totalorder %s13, 1
    %p193 = scmp.ne.s32.totalorder %s188, %s190
    %p194 = scmp.eq.s32.totalorder %s13, 0
    %p195 = por %p193, %p194
    %p196 = scmp.ne.s32.totalorder %s188, %s190
    %p197 = scmp.eq.s32.totalorder %s18, 1
    %p198 = por %p196, %p197
    %p199 = scmp.ne.s32.totalorder %s190, %s191
    %p200 = scmp.eq.s32.totalorder %s18, 0
    %p201 = por %p199, %p200
    %p202 = scmp.ne.s32.totalorder %s190, %s191
    %p203 = scmp.eq.s32.totalorder %s19, 1
    %p204 = por %p202, %p203
    %p206 = scmp.ne.s32.totalorder %s191, %s205
    %p207 = scmp.eq.s32.totalorder %s19, 0
    %p208 = por %p206, %p207
    %s209 = ssub.s32 %s20, %s32
    %s210 = ssub.s32 %s21, %s28
    %s211 = sor.u32 %s209, %s210
    %p212 = scmp.eq.s32.totalorder %s211, 0
    %s214 = sadd.s32 %s213, 1
    %s215 = scalar_select %p212, %s213, %s214
    %p218 = pneg %p212
    %p219 = scmp.eq.s32.totalorder %s13, 1
    %p220 = por %p218, %p219
    %p221 = scmp.ne.s32.totalorder %s213, %s216
    %p222 = scmp.eq.s32.totalorder %s13, 0
    %p223 = por %p221, %p222
    %p224 = scmp.ne.s32.totalorder %s213, %s216
    %p225 = scmp.eq.s32.totalorder %s18, 1
    %p226 = por %p224, %p225
    %p227 = scmp.ne.s32.totalorder %s216, %s217
    %p228 = scmp.eq.s32.totalorder %s18, 0
    %p229 = por %p227, %p228
    %p230 = scmp.ne.s32.totalorder %s216, %s217
    %p231 = scmp.eq.s32.totalorder %s19, 1
    %p232 = por %p230, %p231
    %p234 = scmp.ne.s32.totalorder %s217, %s233
    %p235 = scmp.eq.s32.totalorder %s19, 0
    %p236 = por %p234, %p235
    %p237 = scmp.le.s32.totalorder 1, %s13
    %p238 = scmp.lt.s32.totalorder %s13, 3
    %p239 = pnand %p237, %p238
    %p240 = pneg %p239
    // Predicated region
    $region9: #{mtur_forward.3} parent=5 // pred_check
      _
    $region10: #{mtur_forward.3} parent=5 // pred_check_branch
      %242 = sbr.rel (%p239) target = $region12
    $region11: #{mtur_forward.3} parent=5 // pred_region
      %s243 = ssub.s32 %s13, 1
      // Predicated region
      $region13: #{mtur_forward.3} parent=11 // pred_check
        %p244 = pneg %p180
      $region14: #{mtur_forward.3} parent=11 // pred_check_branch
        %246 = sbr.rel (%p244) target = $region16
      $region15: #{mtur_forward.3} parent=11 // pred_region
        _
      $region16: #{mtur_forward.3} parent=11 // pred_fallthru
        _
      // Predicated region
      $region17: #{mtur_forward.3} parent=11 // pred_check
        %p247 = pneg %p201
      $region18: #{mtur_forward.3} parent=11 // pred_check_branch
        %249 = sbr.rel (%p247) target = $region20
      $region19: #{mtur_forward.3} parent=11 // pred_region
        _
      $region20: #{mtur_forward.3} parent=11 // pred_fallthru
        _
    $region12: #{mtur_forward.3} parent=5 // pred_fallthru
      _
    %p250 = scmp.lt.s32.totalorder %s13, 2
    // Predicated region
    $region21: #{mtur_forward.3} parent=5 // pred_check
      %p251 = pneg %p250
    $region22: #{mtur_forward.3} parent=5 // pred_check_branch
      %253 = sbr.rel (%p251) target = $region24
    $region23: #{mtur_forward.3} parent=5 // pred_region
      // Predicated region
      $region25: #{mtur_forward.3} parent=23 // pred_check
        %p254 = pneg %p47
      $region26: #{mtur_forward.3} parent=23 // pred_check_branch
        %256 = sbr.rel (%p254) target = $region28
      $region27: #{mtur_forward.3} parent=23 // pred_region
        %s257 = smul.u32 8, %s21
        %p258 = scmp.lt.s32.totalorder %s20, 1
        %s259 = scalar_select %p258, %s20, 1
        %p260 = scmp.lt.s32.totalorder %s257, 7
        %s261 = scalar_select %p260, %s257, 7
        %s262 = smul.addr %s259, 8
        %s263 = sadd.s32 %s261, %s262
        %s264 = smul.addr %s263, 4
        %s265 = scalar_lea.vmem %s0, %s264
        %s266 = smul.u32 8, %s21
      $region28: #{mtur_forward.3} parent=23 // pred_fallthru
        _
      // Predicated region
      $region29: #{mtur_forward.3} parent=23 // pred_check
        %p267 = pneg %p73
      $region30: #{mtur_forward.3} parent=23 // pred_check_branch
        %269 = sbr.rel (%p267) target = $region32
      $region31: #{mtur_forward.3} parent=23 // pred_region
        %p270 = scmp.lt.s32.totalorder %s20, 1
        %s271 = scalar_select %p270, %s20, 1
        %s272 = smul.addr %s271, 4
        %s273 = scalar_lea.vmem %s1, %s272
      $region32: #{mtur_forward.3} parent=23 // pred_fallthru
        _
      // Predicated region
      $region33: #{mtur_forward.3} parent=23 // pred_check
        %p274 = pneg %p99
      $region34: #{mtur_forward.3} parent=23 // pred_check_branch
        %276 = sbr.rel (%p274) target = $region36
      $region35: #{mtur_forward.3} parent=23 // pred_region
        %p277 = scmp.lt.s32.totalorder %s20, 1
        %s278 = scalar_select %p277, %s20, 1
        %s279 = smul.addr %s278, 2
        %s280 = smul.addr %s279, 4
        %s281 = scalar_lea.vmem %s2, %s280
      $region36: #{mtur_forward.3} parent=23 // pred_fallthru
        _
      // Predicated region
      $region37: #{mtur_forward.3} parent=23 // pred_check
        %p282 = pneg %p127
      $region38: #{mtur_forward.3} parent=23 // pred_check_branch
        %284 = sbr.rel (%p282) target = $region40
      $region39: #{mtur_forward.3} parent=23 // pred_region
        %s285 = smul.u32 8, %s21
        %p286 = scmp.lt.s32.totalorder %s20, 1
        %s287 = scalar_select %p286, %s20, 1
        %p288 = scmp.lt.s32.totalorder %s285, 7
        %s289 = scalar_select %p288, %s285, 7
        %s290 = smul.addr %s287, 8
        %s291 = sadd.s32 %s289, %s290
        %s292 = smul.addr %s291, 8
        %s293 = scalar_lea.vmem %s3, %s292
        %s294 = smul.u32 8, %s21
      $region40: #{mtur_forward.3} parent=23 // pred_fallthru
        _
      // Predicated region
      $region41: #{mtur_forward.3} parent=23 // pred_check
        %p295 = pneg %p153
      $region42: #{mtur_forward.3} parent=23 // pred_check_branch
        %297 = sbr.rel (%p295) target = $region44
      $region43: #{mtur_forward.3} parent=23 // pred_region
        %p298 = scmp.lt.s32.totalorder %s20, 1
        %s299 = scalar_select %p298, %s20, 1
        %s300 = scalar_lea.vmem %s4, %s299
      $region44: #{mtur_forward.3} parent=23 // pred_fallthru
        _
    $region24: #{mtur_forward.3} parent=5 // pred_fallthru
      _
    %p301 = scmp.le.s32.totalorder 1, %s13
    %p302 = scmp.lt.s32.totalorder %s13, 3
    %p303 = pnand %p301, %p302
    %p304 = pneg %p303
    // Predicated region
    $region45: #{mtur_forward.3} parent=5 // pred_check
      _
    $region46: #{mtur_forward.3} parent=5 // pred_check_branch
      %306 = sbr.rel (%p303) target = $region48
    $region47: #{mtur_forward.3} parent=5 // pred_region
      %s307 = ssub.s32 %s13, 1
      %s308 = smul.u32 8, %s23
      %p309 = scmp.lt.s32.totalorder %s22, 1
      %s310 = scalar_select %p309, %s22, 1
      %p311 = scmp.lt.s32.totalorder %s308, 7
      %s312 = scalar_select %p311, %s308, 7
      %s313 = smul.addr %s310, 8
      %s314 = sadd.s32 %s312, %s313
      %s315 = smul.addr %s314, 4
      %s316 = scalar_lea.vmem %s0, %s315
      %p317 = pneg %p53
      %p318 = pneg %p50
      %p319 = scmp.lt.s32.totalorder %s22, 1
      %s320 = scalar_select %p319, %s22, 1
      %s321 = smul.addr %s320, 4
      %s322 = scalar_lea.vmem %s1, %s321
      %p323 = pneg %p79
      %p324 = pneg %p76
      %p325 = scmp.lt.s32.totalorder %s22, 1
      %s326 = scalar_select %p325, %s22, 1
      %s327 = smul.addr %s326, 2
      %s328 = smul.addr %s327, 4
      %s329 = scalar_lea.vmem %s2, %s328
      %p330 = pneg %p105
      %p331 = pneg %p102
      %s332 = smul.u32 8, %s23
      %p333 = scmp.lt.s32.totalorder %s22, 1
      %s334 = scalar_select %p333, %s22, 1
      %p335 = scmp.lt.s32.totalorder %s332, 7
      %s336 = scalar_select %p335, %s332, 7
      %s337 = smul.addr %s334, 8
      %s338 = sadd.s32 %s336, %s337
      %s339 = smul.addr %s338, 8
      %s340 = scalar_lea.vmem %s3, %s339
      %p341 = pneg %p133
      %p342 = pneg %p130
      %p343 = scmp.lt.s32.totalorder %s22, 1
      %s344 = scalar_select %p343, %s22, 1
      %s345 = scalar_lea.vmem %s4, %s344
      %p346 = pneg %p159
      %p347 = pneg %p156
      %p348 = pneg %p180
      %p349 = pneg %p177
      %p350 = pneg %p201
      %p351 = pneg %p198
      %p352 = pneg %p229
      %p353 = pneg %p226
      %s354 = smul.u32 8, %s23
      %p355 = scmp.lt.s32.totalorder %s22, 1
      %s356 = scalar_select %p355, %s22, 1
      %p357 = scmp.lt.s32.totalorder %s354, 7
      %s358 = scalar_select %p357, %s354, 7
      %s359 = smul.addr %s356, 8
      %s360 = sadd.s32 %s358, %s359
      %s361 = smul.addr %s360, 8
      %s362 = scalar_lea.vmem %s7, %s361
      %s363 = smul.u32 8, %s23
      %p364 = scmp.lt.s32.totalorder %s22, 1
      %s365 = scalar_select %p364, %s22, 1
      %p366 = scmp.lt.s32.totalorder %s363, 7
      %s367 = scalar_select %p366, %s363, 7
      %s368 = smul.addr %s365, 8
      %s369 = sadd.s32 %s367, %s368
      %s370 = smul.addr %s369, 4
      %s371 = scalar_lea.vmem %s0, %s370
      %s372 = smul.u32 8, %s23
      %p373 = scmp.lt.s32.totalorder %s22, 1
      %s374 = scalar_select %p373, %s22, 1
      %s375 = smul.addr %s374, 4
      %s376 = scalar_lea.vmem %s1, %s375
      %p377 = scmp.lt.s32.totalorder %s22, 1
      %s378 = scalar_select %p377, %s22, 1
      %s379 = smul.addr %s378, 2
      %s380 = smul.addr %s379, 4
      %s381 = scalar_lea.vmem %s2, %s380
      %s382 = smul.u32 8, %s23
      %p383 = scmp.lt.s32.totalorder %s22, 1
      %s384 = scalar_select %p383, %s22, 1
      %p385 = scmp.lt.s32.totalorder %s382, 7
      %s386 = scalar_select %p385, %s382, 7
      %s387 = smul.addr %s384, 8
      %s388 = sadd.s32 %s386, %s387
      %s389 = smul.addr %s388, 8
      %s390 = scalar_lea.vmem %s3, %s389
      %s391 = smul.u32 8, %s23
      %p392 = scmp.lt.s32.totalorder %s22, 1
      %s393 = scalar_select %p392, %s22, 1
      %s394 = scalar_lea.vmem %s4, %s393
      %s395 = smul.u32 8, %s23
      %p396 = scmp.lt.s32.totalorder %s22, 1
      %s397 = scalar_select %p396, %s22, 1
      %p398 = scmp.lt.s32.totalorder %s395, 7
      %s399 = scalar_select %p398, %s395, 7
      %s400 = smul.addr %s397, 8
      %s401 = sadd.s32 %s399, %s400
      %s402 = smul.addr %s401, 8
      %s403 = scalar_lea.vmem %s7, %s402
      %s404 = smul.u32 8, %s23
      %v406 = vld [vmem:[%s371] sm:$0xf]
      %v407 = vld [vmem:[%s371 + $0x4] sm:$0xf]
      %v408 = vld [vmem:[%s371 + $0x8] sm:$0xf]
      %v409 = vld [vmem:[%s371 + $0xc] sm:$0xf]
      %v410 = vld [vmem:[%s371 + $0x10] sm:$0xf]
      %v411 = vld [vmem:[%s371 + $0x14] sm:$0xf]
      %v412 = vld [vmem:[%s371 + $0x18] sm:$0xf]
      %v413 = vld [vmem:[%s371 + $0x1c] sm:$0xf]
      %v414 = vld [vmem:[%s376] sm:$0xf]
      %v415 = vld [vmem:[%s381] sm:$0xf]
      %v416 = vld [vmem:[%s381 + $0x4] sm:$0xf]
      %v417 = vld [vmem:[%s390] sm:$0xff]
      %v418 = vld [vmem:[%s390 + $0x8] sm:$0xff]
      %v419 = vld [vmem:[%s390 + $0x10] sm:$0xff]
      %v420 = vld [vmem:[%s390 + $0x18] sm:$0xff]
      %v421 = vld [vmem:[%s390 + $0x20] sm:$0xff]
      %v422 = vld [vmem:[%s390 + $0x28] sm:$0xff]
      %v423 = vld [vmem:[%s390 + $0x30] sm:$0xff]
      %v424 = vld [vmem:[%s390 + $0x38] sm:$0xff]
      %v425 = vld [vmem:[%s394] sm:$0x1]
      %v434 = vunpack.c.l.b16 %v406
      %v435 = vunpack.c.l.b16 %v407
      %v436 = vunpack.c.l.b16 %v408
      %v437 = vunpack.c.l.b16 %v409
      %v438 = vunpack.c.l.b16 %v410
      %v439 = vunpack.c.l.b16 %v411
      %v440 = vunpack.c.l.b16 %v412
      %v441 = vunpack.c.l.b16 %v413
      %v442 = vpack.c.b16 %v435, %v434
      %v443 = vpack.c.b16 %v437, %v436
      %v444 = vpack.c.b16 %v439, %v438
      %v445 = vpack.c.b16 %v441, %v440
      %vm446 = vcmask 64512
      %v448 = vsel %vm446, %v442, 0
      %v451 = vsel %vm446, %v443, 0
      %v454 = vsel %vm446, %v444, 0
      %v457 = vsel %vm446, %v445, 0
      %vm459 = vcmask 1043456
      %v461 = vsel %vm459, %v414, 0
      %463 = vmatprep.subr.bf16.mxu0 0
      %464 = vmatpush1.bf16.msra.mxu0 0
      %465 = vmatprep.subr.bf16.mxu0 0
      %466 = vmatpush1.bf16.msra.mxu0 0
      %467 = vmatprep.subr.bf16.mxu0 0
      %468 = vmatpush1.bf16.msra.mxu0 0
      %469 = vmatprep.subr.bf16.mxu0 0
      %470 = vmatpush1.bf16.msra.mxu0 0
      %471 = vmatprep.subr.bf16.mxu0 0
      %472 = vmatpush1.bf16.msra.mxu0 0
      %473 = vmatprep.subr.bf16.mxu0 0
      %474 = vmatpush1.bf16.msra.mxu0 0
      %475 = vmatprep.subr.bf16.mxu0 0
      %476 = vmatpush1.bf16.msra.mxu0 0
      %477 = vmatprep.subr.bf16.mxu0 0
      %478 = vmatpush1.bf16.msra.mxu0 %v461
      %479 = vmatprep.subr.bf16.mxu0 0
      %480 = vmatpush2.bf16.msra.mxu0 0
      %481 = vmatprep.subr.bf16.mxu0 0
      %482 = vmatpush2.bf16.msra.mxu0 0
      %483 = vmatprep.subr.bf16.mxu0 0
      %484 = vmatpush2.bf16.msra.mxu0 0
      %485 = vmatprep.subr.bf16.mxu0 0
      %486 = vmatpush2.bf16.msra.mxu0 0
      %487 = vmatprep.subr.bf16.mxu0 0
      %488 = vmatpush2.bf16.msra.mxu0 0
      %489 = vmatprep.subr.bf16.mxu0 0
      %490 = vmatpush2.bf16.msra.mxu0 0
      %491 = vmatprep.subr.bf16.mxu0 0
      %492 = vmatpush2.bf16.msra.mxu0 0
      %493 = vmatprep.subr.bf16.mxu0 0
      %494 = vmatpush2.bf16.msra.mxu0 0
      %495 = vmatprep.mubr.bf16.mxu0 0
      %496 = vmatmul.mubr.bf16.gmra.mxu0 %v448
      %v497 = vpop.f32.mrf.mxu0
      %v498 = vadd.f32 0.0, %v497
      %v499 = vpop.f32.mrf.mxu0
      %v500 = vpop.f32.mrf.mxu0
      %v501 = vadd.f32 0.0, %v500
      %v502 = vpop.f32.mrf.mxu0
      %503 = vmatprep.mubr.bf16.mxu0 0
      %504 = vmatmul.mubr.bf16.gmra.mxu0 %v451
      %v505 = vpop.f32.mrf.mxu0
      %v506 = vadd.f32 0.0, %v505
      %v507 = vpop.f32.mrf.mxu0
      %v508 = vpop.f32.mrf.mxu0
      %v509 = vadd.f32 0.0, %v508
      %v510 = vpop.f32.mrf.mxu0
      %511 = vmatprep.mubr.bf16.mxu0 0
      %512 = vmatmul.mubr.bf16.gmra.mxu0 %v454
      %v513 = vpop.f32.mrf.mxu0
      %v514 = vadd.f32 0.0, %v513
      %v515 = vpop.f32.mrf.mxu0
      %v516 = vpop.f32.mrf.mxu0
      %v517 = vadd.f32 0.0, %v516
      %v518 = vpop.f32.mrf.mxu0
      %519 = vmatprep.mubr.bf16.mxu0 0
      %520 = vmatmul.mubr.bf16.gmra.mxu0 %v457
      %v521 = vpop.f32.mrf.mxu0
      %v522 = vadd.f32 0.0, %v521
      %v523 = vpop.f32.mrf.mxu0
      %v524 = vpop.f32.mrf.mxu0
      %v525 = vadd.f32 0.0, %v524
      %v526 = vpop.f32.mrf.mxu0
      %527 = vdwg.mxu0
      %vm528 = vcmask 130048
      %v529 = vsel %vm528, %v498, -inf
      %530 = vmax.xlane.f32.xlu0 %v529
      %v531 = vpop.xlane.xlu0 %530
      %v532 = vsel %vm528, %v501, -inf
      %533 = vmax.xlane.f32.xlu0 %v532
      %v534 = vpop.xlane.xlu0 %533
      %v535 = vsel %vm528, %v506, -inf
      %536 = vmax.xlane.f32.xlu0 %v535
      %v537 = vpop.xlane.xlu0 %536
      %v538 = vsel %vm528, %v509, -inf
      %539 = vmax.xlane.f32.xlu0 %v538
      %v540 = vpop.xlane.xlu0 %539
      %v541 = vsel %vm528, %v514, -inf
      %542 = vmax.xlane.f32.xlu0 %v541
      %v543 = vpop.xlane.xlu0 %542
      %v544 = vsel %vm528, %v517, -inf
      %545 = vmax.xlane.f32.xlu0 %v544
      %v546 = vpop.xlane.xlu0 %545
      %v547 = vsel %vm528, %v522, -inf
      %548 = vmax.xlane.f32.xlu0 %v547
      %v549 = vpop.xlane.xlu0 %548
      %v550 = vsel %vm528, %v525, -inf
      %551 = vmax.xlane.f32.xlu0 %v550
      %v552 = vpop.xlane.xlu0 %551
      %v553 = vsub.f32 %v498, %v531
      %v554 = vsub.f32 %v501, %v534
      %v555 = vsub.f32 %v506, %v537
      %v556 = vsub.f32 %v509, %v540
      %v557 = vsub.f32 %v514, %v543
      %v558 = vsub.f32 %v517, %v546
      %v559 = vsub.f32 %v522, %v549
      %v560 = vsub.f32 %v525, %v552
      %v561 = vmul.f32 %v553, 1.442695
      %v562 = vpow.pop %v561
      %v563 = vmul.f32 %v554, 1.442695
      %v564 = vpow.pop %v563
      %v565 = vmul.f32 %v555, 1.442695
      %v566 = vpow.pop %v565
      %v567 = vmul.f32 %v556, 1.442695
      %v568 = vpow.pop %v567
      %v569 = vmul.f32 %v557, 1.442695
      %v570 = vpow.pop %v569
      %v571 = vmul.f32 %v558, 1.442695
      %v572 = vpow.pop %v571
      %v573 = vmul.f32 %v559, 1.442695
      %v574 = vpow.pop %v573
      %v575 = vmul.f32 %v560, 1.442695
      %v576 = vpow.pop %v575
      %v577 = vsel %vm528, %v562, 0.0
      %578 = vadd.xlane.f32.xlu0 %v577
      %v579 = vpop.xlane.xlu0 %578
      %v580 = vsel %vm528, %v564, 0.0
      %581 = vadd.xlane.f32.xlu0 %v580
      %v582 = vpop.xlane.xlu0 %581
      %v583 = vsel %vm528, %v566, 0.0
      %584 = vadd.xlane.f32.xlu0 %v583
      %v585 = vpop.xlane.xlu0 %584
      %v586 = vsel %vm528, %v568, 0.0
      %587 = vadd.xlane.f32.xlu0 %v586
      %v588 = vpop.xlane.xlu0 %587
      %v589 = vsel %vm528, %v570, 0.0
      %590 = vadd.xlane.f32.xlu0 %v589
      %v591 = vpop.xlane.xlu0 %590
      %v592 = vsel %vm528, %v572, 0.0
      %593 = vadd.xlane.f32.xlu0 %v592
      %v594 = vpop.xlane.xlu0 %593
      %v595 = vsel %vm528, %v574, 0.0
      %596 = vadd.xlane.f32.xlu0 %v595
      %v597 = vpop.xlane.xlu0 %596
      %v598 = vsel %vm528, %v576, 0.0
      %599 = vadd.xlane.f32.xlu0 %v598
      %v600 = vpop.xlane.xlu0 %599
      %v601 = vrcp.pop %v579
      %v602 = vrcp.pop %v582
      %v603 = vrcp.pop %v585
      %v604 = vrcp.pop %v588
      %v605 = vrcp.pop %v591
      %v606 = vrcp.pop %v594
      %v607 = vrcp.pop %v597
      %v608 = vrcp.pop %v600
      %v609 = vadd.f32 %v417, 1e-06
      %v610 = vadd.f32 %v418, 1e-06
      %v611 = vadd.f32 %v419, 1e-06
      %v612 = vadd.f32 %v420, 1e-06
      %v613 = vadd.f32 %v421, 1e-06
      %v614 = vadd.f32 %v422, 1e-06
      %v615 = vadd.f32 %v423, 1e-06
      %v616 = vadd.f32 %v424, 1e-06
      %v617 = vrcp.pop %v609
      %v618 = vrcp.pop %v610
      %v619 = vrcp.pop %v611
      %v620 = vrcp.pop %v612
      %v621 = vrcp.pop %v613
      %v622 = vrcp.pop %v614
      %v623 = vrcp.pop %v615
      %v624 = vrcp.pop %v616
      %v625 = vadd.f32 %v425, 1e-06
      %v626 = vrcp.pop %v625
      %628 = vset.pattern.permute.xlu0 0
      %629 = vperm.xlu0 %628, %v417
      %v630 = vpop.permute.xlu0 %629
      %633 = vset.pattern.permute.xlu0 0
      %634 = vperm.xlu0 %633, %v418
      %v635 = vpop.permute.xlu0 %634
      %638 = vset.pattern.permute.xlu0 0
      %639 = vperm.xlu0 %638, %v419
      %v640 = vpop.permute.xlu0 %639
      %643 = vset.pattern.permute.xlu0 0
      %644 = vperm.xlu0 %643, %v420
      %v645 = vpop.permute.xlu0 %644
      %648 = vset.pattern.permute.xlu0 0
      %649 = vperm.xlu0 %648, %v421
      %v650 = vpop.permute.xlu0 %649
      %653 = vset.pattern.permute.xlu0 0
      %654 = vperm.xlu0 %653, %v422
      %v655 = vpop.permute.xlu0 %654
      %658 = vset.pattern.permute.xlu0 0
      %659 = vperm.xlu0 %658, %v423
      %v660 = vpop.permute.xlu0 %659
      %663 = vset.pattern.permute.xlu0 0
      %664 = vperm.xlu0 %663, %v424
      %v665 = vpop.permute.xlu0 %664
      %v668 = vlaneseq
      %v669 = vshrl.u32 %v668, 7
      %v670 = vsub.s32 0, %v669
      %v671 = vrot.slane %v626, %v670
      %v673 = vmul.f32 %v630, %v671
      %v674 = vmul.f32 %v635, %v671
      %v675 = vmul.f32 %v640, %v671
      %v676 = vmul.f32 %v645, %v671
      %v677 = vmul.f32 %v650, %v671
      %v678 = vmul.f32 %v655, %v671
      %v679 = vmul.f32 %v660, %v671
      %v680 = vmul.f32 %v665, %v671
      %v682 = vlaneseq
      %v683 = vshrl.u32 %v682, 7
      %v684 = vsub.s32 0, %v683
      %v685 = vrot.slane %v425, %v684
      %688 = vset.pattern.permute.xlu0 0
      %689 = vperm.xlu0 %688, %v617
      %v690 = vpop.permute.xlu0 %689
      %693 = vset.pattern.permute.xlu0 0
      %694 = vperm.xlu0 %693, %v618
      %v695 = vpop.permute.xlu0 %694
      %698 = vset.pattern.permute.xlu0 0
      %699 = vperm.xlu0 %698, %v619
      %v700 = vpop.permute.xlu0 %699
      %703 = vset.pattern.permute.xlu0 0
      %704 = vperm.xlu0 %703, %v620
      %v705 = vpop.permute.xlu0 %704
      %708 = vset.pattern.permute.xlu0 0
      %709 = vperm.xlu0 %708, %v621
      %v710 = vpop.permute.xlu0 %709
      %713 = vset.pattern.permute.xlu0 0
      %714 = vperm.xlu0 %713, %v622
      %v715 = vpop.permute.xlu0 %714
      %718 = vset.pattern.permute.xlu0 0
      %719 = vperm.xlu0 %718, %v623
      %v720 = vpop.permute.xlu0 %719
      %723 = vset.pattern.permute.xlu0 0
      %724 = vperm.xlu0 %723, %v624
      %v725 = vpop.permute.xlu0 %724
      %v727 = vmul.f32 %v685, %v690
      %v728 = vmul.f32 %v685, %v695
      %v729 = vmul.f32 %v685, %v700
      %v730 = vmul.f32 %v685, %v705
      %v731 = vmul.f32 %v685, %v710
      %v732 = vmul.f32 %v685, %v715
      %v733 = vmul.f32 %v685, %v720
      %v734 = vmul.f32 %v685, %v725
      %v735 = vmin.f32 %v673, %v727
      %v736 = vmin.f32 %v674, %v728
      %v737 = vmin.f32 %v675, %v729
      %v738 = vmin.f32 %v676, %v730
      %v739 = vmin.f32 %v677, %v731
      %v740 = vmin.f32 %v678, %v732
      %v741 = vmin.f32 %v679, %v733
      %v742 = vmin.f32 %v680, %v734
      %v743 = vmul.f32 %v735, 1.442695
      %v744 = vpow.pop %v743
      %v745 = vmul.f32 %v736, 1.442695
      %v746 = vpow.pop %v745
      %v747 = vmul.f32 %v737, 1.442695
      %v748 = vpow.pop %v747
      %v749 = vmul.f32 %v738, 1.442695
      %v750 = vpow.pop %v749
      %v751 = vmul.f32 %v739, 1.442695
      %v752 = vpow.pop %v751
      %v753 = vmul.f32 %v740, 1.442695
      %v754 = vpow.pop %v753
      %v755 = vmul.f32 %v741, 1.442695
      %v756 = vpow.pop %v755
      %v757 = vmul.f32 %v742, 1.442695
      %v758 = vpow.pop %v757
      %v759 = vsel %vm528, %v744, 0.0
      %760 = vadd.xlane.f32.xlu0 %v759
      %v761 = vpop.xlane.xlu0 %760
      %v762 = vsel %vm528, %v746, 0.0
      %763 = vadd.xlane.f32.xlu0 %v762
      %v764 = vpop.xlane.xlu0 %763
      %v765 = vsel %vm528, %v748, 0.0
      %766 = vadd.xlane.f32.xlu0 %v765
      %v767 = vpop.xlane.xlu0 %766
      %v768 = vsel %vm528, %v750, 0.0
      %769 = vadd.xlane.f32.xlu0 %v768
      %v770 = vpop.xlane.xlu0 %769
      %v771 = vsel %vm528, %v752, 0.0
      %772 = vadd.xlane.f32.xlu0 %v771
      %v773 = vpop.xlane.xlu0 %772
      %v774 = vsel %vm528, %v754, 0.0
      %775 = vadd.xlane.f32.xlu0 %v774
      %v776 = vpop.xlane.xlu0 %775
      %v777 = vsel %vm528, %v756, 0.0
      %778 = vadd.xlane.f32.xlu0 %v777
      %v779 = vpop.xlane.xlu0 %778
      %v780 = vsel %vm528, %v758, 0.0
      %781 = vadd.xlane.f32.xlu0 %v780
      %v782 = vpop.xlane.xlu0 %781
      %v783 = vrcp.pop %v761
      %v784 = vrcp.pop %v764
      %v785 = vrcp.pop %v767
      %v786 = vrcp.pop %v770
      %v787 = vrcp.pop %v773
      %v788 = vrcp.pop %v776
      %v789 = vrcp.pop %v779
      %v790 = vrcp.pop %v782
      %v791 = vmul.f32 %v562, %v744
      %v792 = vmul.f32 %v564, %v746
      %v793 = vmul.f32 %v566, %v748
      %v794 = vmul.f32 %v568, %v750
      %v795 = vmul.f32 %v570, %v752
      %v796 = vmul.f32 %v572, %v754
      %v797 = vmul.f32 %v574, %v756
      %v798 = vmul.f32 %v576, %v758
      %v799 = vmul.f32 %v601, %v783
      %v800 = vmul.f32 %v602, %v784
      %v801 = vmul.f32 %v603, %v785
      %v802 = vmul.f32 %v604, %v786
      %v803 = vmul.f32 %v605, %v787
      %v804 = vmul.f32 %v606, %v788
      %v805 = vmul.f32 %v607, %v789
      %v806 = vmul.f32 %v608, %v790
      %v807 = vmul.f32 %v791, %v799
      %v808 = vmul.f32 %v792, %v800
      %v809 = vmul.f32 %v793, %v801
      %v810 = vmul.f32 %v794, %v802
      %v811 = vmul.f32 %v795, %v803
      %v812 = vmul.f32 %v796, %v804
      %v813 = vmul.f32 %v797, %v805
      %v814 = vmul.f32 %v798, %v806
      %v815 = vmul.f32 %v807, 1.442695
      %v816 = vpow.pop %v815
      %v817 = vmul.f32 %v808, 1.442695
      %v818 = vpow.pop %v817
      %v819 = vmul.f32 %v809, 1.442695
      %v820 = vpow.pop %v819
      %v821 = vmul.f32 %v810, 1.442695
      %v822 = vpow.pop %v821
      %v823 = vmul.f32 %v811, 1.442695
      %v824 = vpow.pop %v823
      %v825 = vmul.f32 %v812, 1.442695
      %v826 = vpow.pop %v825
      %v827 = vmul.f32 %v813, 1.442695
      %v828 = vpow.pop %v827
      %v829 = vmul.f32 %v814, 1.442695
      %v830 = vpow.pop %v829
      %v831 = vsel %vm528, %v816, 0.0
      %832 = vadd.xlane.f32.xlu0 %v831
      %v833 = vpop.xlane.xlu0 %832
      %v834 = vsel %vm528, %v818, 0.0
      %835 = vadd.xlane.f32.xlu0 %v834
      %v836 = vpop.xlane.xlu0 %835
      %v837 = vsel %vm528, %v820, 0.0
      %838 = vadd.xlane.f32.xlu0 %v837
      %v839 = vpop.xlane.xlu0 %838
      %v840 = vsel %vm528, %v822, 0.0
      %841 = vadd.xlane.f32.xlu0 %v840
      %v842 = vpop.xlane.xlu0 %841
      %v843 = vsel %vm528, %v824, 0.0
      %844 = vadd.xlane.f32.xlu0 %v843
      %v845 = vpop.xlane.xlu0 %844
      %v846 = vsel %vm528, %v826, 0.0
      %847 = vadd.xlane.f32.xlu0 %v846
      %v848 = vpop.xlane.xlu0 %847
      %v849 = vsel %vm528, %v828, 0.0
      %850 = vadd.xlane.f32.xlu0 %v849
      %v851 = vpop.xlane.xlu0 %850
      %v852 = vsel %vm528, %v830, 0.0
      %853 = vadd.xlane.f32.xlu0 %v852
      %v854 = vpop.xlane.xlu0 %853
      %v855 = vrcp.pop %v833
      %v856 = vrcp.pop %v836
      %v857 = vrcp.pop %v839
      %v858 = vrcp.pop %v842
      %v859 = vrcp.pop %v845
      %v860 = vrcp.pop %v848
      %v861 = vrcp.pop %v851
      %v862 = vrcp.pop %v854
      %v863 = vmul.f32 %v816, %v855
      %v864 = vmul.f32 %v818, %v856
      %v865 = vmul.f32 %v820, %v857
      %v866 = vmul.f32 %v822, %v858
      %v867 = vmul.f32 %v824, %v859
      %v868 = vmul.f32 %v826, %v860
      %v869 = vmul.f32 %v828, %v861
      %v870 = vmul.f32 %v830, %v862
      %v871 = vpack.c.bf16 %v864, %v863
      %v872 = vpack.c.bf16 %v866, %v865
      %v873 = vpack.c.bf16 %v868, %v867
      %v874 = vpack.c.bf16 %v870, %v869
      %v877 = vunpack.c.l.b16 %v415
      %v878 = vunpack.c.l.b16 %v416
      %v879 = vpack.c.b16 %v878, %v877
      %v882 = vsel %vm528, %v871, 0
      %v885 = vsel %vm528, %v872, 0
      %v888 = vsel %vm528, %v873, 0
      %v891 = vsel %vm528, %v874, 0
      %893 = vmatprep.subr.bf16.mxu0 0
      %894 = vmatpush1.bf16.msra.mxu0 0
      %895 = vmatprep.subr.bf16.mxu0 0
      %896 = vmatpush1.bf16.msra.mxu0 0
      %897 = vmatprep.subr.bf16.mxu0 0
      %898 = vmatpush1.bf16.msra.mxu0 0
      %899 = vmatprep.subr.bf16.mxu0 0
      %900 = vmatpush1.bf16.msra.mxu0 0
      %901 = vmatprep.subr.bf16.mxu0 0
      %902 = vmatpush1.bf16.msra.mxu0 0
      %903 = vmatprep.subr.bf16.mxu0 0
      %904 = vmatpush1.bf16.msra.mxu0 0
      %905 = vmatprep.subr.bf16.mxu0 0
      %906 = vmatpush1.bf16.msra.mxu0 0
      %907 = vmatprep.subr.bf16.mxu0 0
      %908 = vmatpush1.bf16.msra.mxu0 %v879
      %909 = vmatprep.subr.bf16.mxu0 0
      %910 = vmatpush2.bf16.msra.mxu0 0
      %911 = vmatprep.subr.bf16.mxu0 0
      %912 = vmatpush2.bf16.msra.mxu0 0
      %913 = vmatprep.subr.bf16.mxu0 0
      %914 = vmatpush2.bf16.msra.mxu0 0
      %915 = vmatprep.subr.bf16.mxu0 0
      %916 = vmatpush2.bf16.msra.mxu0 0
      %917 = vmatprep.subr.bf16.mxu0 0
      %918 = vmatpush2.bf16.msra.mxu0 0
      %919 = vmatprep.subr.bf16.mxu0 0
      %920 = vmatpush2.bf16.msra.mxu0 0
      %921 = vmatprep.subr.bf16.mxu0 0
      %922 = vmatpush2.bf16.msra.mxu0 0
      %923 = vmatprep.subr.bf16.mxu0 0
      %924 = vmatpush2.bf16.msra.mxu0 0
      %925 = vmatprep.mubr.bf16.mxu0 0
      %926 = vmatmul.mubr.bf16.gmra.mxu0 %v882
      %v927 = vpop.f32.mrf.mxu0
      %v928 = vadd.f32 0.0, %v927
      %v929 = vpop.f32.mrf.mxu0
      %v930 = vpop.f32.mrf.mxu0
      %v931 = vadd.f32 0.0, %v930
      %v932 = vpop.f32.mrf.mxu0
      %933 = vmatprep.mubr.bf16.mxu0 0
      %934 = vmatmul.mubr.bf16.gmra.mxu0 %v885
      %v935 = vpop.f32.mrf.mxu0
      %v936 = vadd.f32 0.0, %v935
      %v937 = vpop.f32.mrf.mxu0
      %v938 = vpop.f32.mrf.mxu0
      %v939 = vadd.f32 0.0, %v938
      %v940 = vpop.f32.mrf.mxu0
      %941 = vmatprep.mubr.bf16.mxu0 0
      %942 = vmatmul.mubr.bf16.gmra.mxu0 %v888
      %v943 = vpop.f32.mrf.mxu0
      %v944 = vadd.f32 0.0, %v943
      %v945 = vpop.f32.mrf.mxu0
      %v946 = vpop.f32.mrf.mxu0
      %v947 = vadd.f32 0.0, %v946
      %v948 = vpop.f32.mrf.mxu0
      %949 = vmatprep.mubr.bf16.mxu0 0
      %950 = vmatmul.mubr.bf16.gmra.mxu0 %v891
      %v951 = vpop.f32.mrf.mxu0
      %v952 = vadd.f32 0.0, %v951
      %v953 = vpop.f32.mrf.mxu0
      %v954 = vpop.f32.mrf.mxu0
      %v955 = vadd.f32 0.0, %v954
      %v956 = vpop.f32.mrf.mxu0
      %957 = vdwg.mxu0
      %v958 = vpack.c.bf16 %v931, %v928
      %v959 = vpack.c.bf16 %v939, %v936
      %v960 = vpack.c.bf16 %v947, %v944
      %v961 = vpack.c.bf16 %v955, %v952
      %v962 = vld [vmem:[%s5] sm:$0xf]
      %v963 = vld [vmem:[%s6] sm:$0x1]
      %v965 = vlaneseq
      %v966 = vshrl.u32 %v965, 7
      %v967 = vsub.s32 0, %v966
      %v968 = vrot.slane %v963, %v967
      %v971 = vsel %vm446, %v958, 0
      %v974 = vsel %vm446, %v959, 0
      %v977 = vsel %vm446, %v960, 0
      %v980 = vsel %vm446, %v961, 0
      %v983 = vsel %vm459, %v962, 0
      %985 = vmatprep.subr.bf16.mxu0 0
      %986 = vmatpush1.bf16.msra.mxu0 0
      %987 = vmatprep.subr.bf16.mxu0 0
      %988 = vmatpush1.bf16.msra.mxu0 0
      %989 = vmatprep.subr.bf16.mxu0 0
      %990 = vmatpush1.bf16.msra.mxu0 0
      %991 = vmatprep.subr.bf16.mxu0 0
      %992 = vmatpush1.bf16.msra.mxu0 0
      %993 = vmatprep.subr.bf16.mxu0 0
      %994 = vmatpush1.bf16.msra.mxu0 0
      %995 = vmatprep.subr.bf16.mxu0 0
      %996 = vmatpush1.bf16.msra.mxu0 0
      %997 = vmatprep.subr.bf16.mxu0 0
      %998 = vmatpush1.bf16.msra.mxu0 0
      %999 = vmatprep.subr.bf16.mxu0 0
      %1000 = vmatpush1.bf16.msra.mxu0 %v983
      %1001 = vmatprep.subr.bf16.mxu0 0
      %1002 = vmatpush2.bf16.msra.mxu0 0
      %1003 = vmatprep.subr.bf16.mxu0 0
      %1004 = vmatpush2.bf16.msra.mxu0 0
      %1005 = vmatprep.subr.bf16.mxu0 0
      %1006 = vmatpush2.bf16.msra.mxu0 0
      %1007 = vmatprep.subr.bf16.mxu0 0
      %1008 = vmatpush2.bf16.msra.mxu0 0
      %1009 = vmatprep.subr.bf16.mxu0 0
      %1010 = vmatpush2.bf16.msra.mxu0 0
      %1011 = vmatprep.subr.bf16.mxu0 0
      %1012 = vmatpush2.bf16.msra.mxu0 0
      %1013 = vmatprep.subr.bf16.mxu0 0
      %1014 = vmatpush2.bf16.msra.mxu0 0
      %1015 = vmatprep.subr.bf16.mxu0 0
      %1016 = vmatpush2.bf16.msra.mxu0 0
      %1017 = vmatprep.mubr.bf16.mxu0 0
      %1018 = vmatmul.mubr.bf16.gmra.mxu0 %v971
      %v1019 = vpop.f32.mrf.mxu0
      %v1020 = vadd.f32 %v968, %v1019
      %v1021 = vpop.f32.mrf.mxu0
      %v1022 = vpop.f32.mrf.mxu0
      %v1023 = vadd.f32 %v968, %v1022
      %v1024 = vpop.f32.mrf.mxu0
      %1025 = vmatprep.mubr.bf16.mxu0 0
      %1026 = vmatmul.mubr.bf16.gmra.mxu0 %v974
      %v1027 = vpop.f32.mrf.mxu0
      %v1028 = vadd.f32 %v968, %v1027
      %v1029 = vpop.f32.mrf.mxu0
      %v1030 = vpop.f32.mrf.mxu0
      %v1031 = vadd.f32 %v968, %v1030
      %v1032 = vpop.f32.mrf.mxu0
      %1033 = vmatprep.mubr.bf16.mxu0 0
      %1034 = vmatmul.mubr.bf16.gmra.mxu0 %v977
      %v1035 = vpop.f32.mrf.mxu0
      %v1036 = vadd.f32 %v968, %v1035
      %v1037 = vpop.f32.mrf.mxu0
      %v1038 = vpop.f32.mrf.mxu0
      %v1039 = vadd.f32 %v968, %v1038
      %v1040 = vpop.f32.mrf.mxu0
      %1041 = vmatprep.mubr.bf16.mxu0 0
      %1042 = vmatmul.mubr.bf16.gmra.mxu0 %v980
      %v1043 = vpop.f32.mrf.mxu0
      %v1044 = vadd.f32 %v968, %v1043
      %v1045 = vpop.f32.mrf.mxu0
      %v1046 = vpop.f32.mrf.mxu0
      %v1047 = vadd.f32 %v968, %v1046
      %v1048 = vpop.f32.mrf.mxu0
      %1049 = vdwg.mxu0
      %1050 = vst.msk [vmem:[%s403] sm:$0xff] %vm528, %v1020
      %1051 = vst.msk [vmem:[%s403 + $0x8] sm:$0xff] %vm528, %v1023
      %1052 = vst.msk [vmem:[%s403 + $0x10] sm:$0xff] %vm528, %v1028
      %1053 = vst.msk [vmem:[%s403 + $0x18] sm:$0xff] %vm528, %v1031
      %1054 = vst.msk [vmem:[%s403 + $0x20] sm:$0xff] %vm528, %v1036
      %1055 = vst.msk [vmem:[%s403 + $0x28] sm:$0xff] %vm528, %v1039
      %1056 = vst.msk [vmem:[%s403 + $0x30] sm:$0xff] %vm528, %v1044
      %1057 = vst.msk [vmem:[%s403 + $0x38] sm:$0xff] %vm528, %v1047
      %s1058 = smul.u32 8, %s23
      %p1059 = scmp.lt.s32.totalorder %s22, 1
      %s1060 = scalar_select %p1059, %s22, 1
      %p1061 = scmp.lt.s32.totalorder %s1058, 7
      %s1062 = scalar_select %p1061, %s1058, 7
      %s1063 = smul.addr %s1060, 8
      %s1064 = sadd.s32 %s1062, %s1063
      %s1065 = smul.addr %s1064, 8
      %s1066 = scalar_lea.vmem %s7, %s1065
      // Predicated region
      $region49: #{mtur_forward.3} parent=47 // pred_check
        %p1067 = pneg %p226
      $region50: #{mtur_forward.3} parent=47 // pred_check_branch
        %1069 = sbr.rel (%p1067) target = $region52
      $region51: #{mtur_forward.3} parent=47 // pred_region
        %s1070 = smul.u32 8, %s23
      $region52: #{mtur_forward.3} parent=47 // pred_fallthru
        _
    $region48: #{mtur_forward.3} parent=5 // pred_fallthru
      _
    %p1071 = scmp.le.s32.totalorder 2, %s13
    // Predicated region
    $region53: #{mtur_forward.3} parent=5 // pred_check
      %p1072 = pneg %p1071
    $region54: #{mtur_forward.3} parent=5 // pred_check_branch
      %1074 = sbr.rel (%p1072) target = $region56
    $region55: #{mtur_forward.3} parent=5 // pred_region
      %s1075 = ssub.s32 %s13, 2
      // Predicated region
      $region57: #{mtur_forward.3} parent=55 // pred_check
        %p1076 = pneg %p232
      $region58: #{mtur_forward.3} parent=55 // pred_check_branch
        %1078 = sbr.rel (%p1076) target = $region60
      $region59: #{mtur_forward.3} parent=55 // pred_region
        %s1079 = smul.u32 8, %s25
        %p1080 = scmp.lt.s32.totalorder %s24, 1
        %s1081 = scalar_select %p1080, %s24, 1
        %p1082 = scmp.lt.s32.totalorder %s1079, 7
        %s1083 = scalar_select %p1082, %s1079, 7
        %s1084 = smul.addr %s1081, 8
        %s1085 = sadd.s32 %s1083, %s1084
        %s1086 = smul.addr %s1085, 8
        %s1087 = scalar_lea.vmem %s7, %s1086
      $region60: #{mtur_forward.3} parent=55 // pred_fallthru
        _
    $region56: #{mtur_forward.3} parent=5 // pred_fallthru
      _
  $region6: #{mtur_forward.3} parent=0 // loop_footer
    %s17 = sadd.s32 1, %s13
  $region7: #{mtur_forward.3} parent=0 // loop_footer_branch
    %12 = sbr.rel target = $region3
  $region8: #{mtur_forward.3} parent=0 // loop_exit
    _

</llo_original>
